<compile_context>
chip_gen: v5e
topology: v5e:2x2
jax: 0.10.0
libtpu: 0.0.40
codegen_flags: <defaults>
</compile_context>

<pallas_src>
import numpy as np
import jax
import jax.numpy as jnp
from jax.experimental import pallas as pl
from jax.experimental.pallas import tpu as pltpu


def _interp_matrix(n_in: int, n_out: int) -> np.ndarray:
    """(n_out, n_in) 1-D linear-interp operator, align_corners=True."""
    m = np.zeros((n_out, n_in), dtype=np.float32)
    if n_out == 1 or n_in == 1:
        # Degenerate axis under align_corners=True maps every output to src 0.
        m[:, 0] = 1.0
        return m
    src = np.arange(n_out, dtype=np.float64) * (n_in - 1) / (n_out - 1)
    lo = np.clip(np.floor(src).astype(np.int64), 0, n_in - 1)
    hi = np.minimum(lo + 1, n_in - 1)
    w = (src - lo).astype(np.float32)
    rows = np.arange(n_out)
    np.add.at(m, (rows, lo), 1.0 - w)
    np.add.at(m, (rows, hi), w)
    return m


def _choose_cb(C: int, D: int) -> int:
    """Channels per grid step."""
    if C <= 1:
        return 1
    # Aim for Cb*D ~ 128 rows (v5e MXU rows; half a v6e/v7x pass), capped so the
    # block-diagonal depth operator's zero-FLOP waste stays bounded.
    target = min(max(1, (128 + D - 1) // D), 16)
    # Keep at least 2 grid steps so v7x's two TensorCores both get work.
    cb = min(target, max(1, C // 2))
    while C % cb:  # prefer a divisor of C (avoids a ragged last block)
        cb -= 1
    return max(cb, 1)


def _resize3d_kernel(x_ref, bhw_ref, wdbd_ref, o_ref, t_ref):
    # x_ref   : (Cb*D,  H*W)     Cb channels, depth folded into rows (lane-dense)
    # bhw_ref : (H*W,   HoWo_p)  kron(Wh, Ww).T, zero-padded to 128-lane width
    # wdbd_ref: (Cb*Do, Cb*D)    kron(I_Cb, Wd), block-diagonal depth operator
    # o_ref   : (Cb*Do, HoWo_p)
    # t_ref   : (Cb*D,  HoWo_p)  f32 VMEM scratch staging the plane-interp result
    t_ref[...] = jnp.dot(x_ref[...], bhw_ref[...],
                         preferred_element_type=jnp.float32)
    y = jnp.dot(wdbd_ref[...], t_ref[...], preferred_element_type=jnp.float32)
    o_ref[...] = y.astype(o_ref.dtype)


def resize3d(x: jax.Array, size=(32, 32, 32), cb=None) -> jax.Array:
    """Pallas equivalent of Resize3D(size).forward(x) for x of shape (C, D, H, W)."""
    C, D, H, W = x.shape
    Do, Ho, Wo = size
    HW = H * W
    HoWo = Ho * Wo
    HoWo_p = ((HoWo + 127) // 128) * 128        # lane-dense output plane width

    if cb is None:
        cb = _choose_cb(C, D)
    if C % cb or (cb * D) % 8 or (cb * Do) % 8:
        cb = C                                   # full-extent rows are always legal
    num_blocks = C // cb

    wd = _interp_matrix(D, Do)                   # (Do, D)
    wh = _interp_matrix(H, Ho)                   # (Ho, H)
    ww = _interp_matrix(W, Wo)                   # (Wo, W)
    # kron(Wh, Ww)[ho*Wo + wo, h*W + w] = Wh[ho, h] * Ww[wo, w]
    bhw = np.kron(wh, ww).T                      # (H*W, Ho*Wo)
    if HoWo_p != HoWo:
        bhw = np.pad(bhw, ((0, 0), (0, HoWo_p - HoWo)))
    wdbd = np.kron(np.eye(cb, dtype=np.float32), wd)     # (cb*Do, cb*D)
    # TODO(synk): for very large spatial planes (H*W * Ho*Wo >~ 4M elements,
    # where the dense kron operator no longer fits v7x's 64 MiB VMEM with
    # headroom), switch to a separable 3-matmul kernel instead of kron(Wh, Ww).

    bhw_j = jnp.asarray(bhw, dtype=x.dtype)      # bf16 inputs feed the MXU natively
    wdbd_j = jnp.asarray(wdbd, dtype=jnp.float32)

    x2 = x.reshape(C * D, HW)                    # contiguous -> metadata-only

    itemsize = x.dtype.itemsize
    flops = 2 * num_blocks * (cb * D * HW * HoWo_p
                              + (cb * Do) * (cb * D) * HoWo_p)
    bytes_accessed = (x.size * itemsize + C * Do * HoWo_p * itemsize
                      + bhw_j.size * bhw_j.dtype.itemsize + wdbd_j.size * 4)

    # Explicit VMEM budget: double-buffered x/out blocks, the (constant-index)
    # operators, and the f32 staging scratch, with ~1.5x headroom.
    # TODO(synk): mark bhw/wdbd single-buffered (pipeline_mode=pl.Buffered(1))
    # once it is universally supported on the main pallas_call path; their
    # index maps are constant, so they are not re-fetched across grid steps.
    vmem_est = (2 * cb * D * HW * itemsize
                + 2 * cb * Do * HoWo_p * itemsize
                + 2 * bhw_j.size * bhw_j.dtype.itemsize
                + 2 * wdbd_j.size * 4
                + cb * D * HoWo_p * 4)
    vmem_limit = int(min(64 << 20, max(16 << 20, round(1.5 * vmem_est))))

    out2 = pl.pallas_call(
        _resize3d_kernel,
        out_shape=jax.ShapeDtypeStruct((C * Do, HoWo_p), x.dtype),
        grid=(num_blocks,),
        in_specs=[
            pl.BlockSpec((cb * D, HW), lambda c: (c, 0)),
            pl.BlockSpec((HW, HoWo_p), lambda c: (0, 0)),
            pl.BlockSpec((cb * Do, cb * D), lambda c: (0, 0)),
        ],
        out_specs=pl.BlockSpec((cb * Do, HoWo_p), lambda c: (c, 0)),
        scratch_shapes=[pltpu.VMEM((cb * D, HoWo_p), jnp.float32)],
        compiler_params=pltpu.CompilerParams(
            dimension_semantics=("parallel",),
            vmem_limit_bytes=vmem_limit),
        cost_estimate=pl.CostEstimate(flops=flops, transcendentals=0,
                                      bytes_accessed=bytes_accessed),
    )(x2, bhw_j, wdbd_j)

    out3 = out2.reshape(C, Do, HoWo_p)
    if HoWo_p != HoWo:
        out3 = out3[..., :HoWo]                  # drop lane padding (copy only when needed)
    return out3.reshape(C, Do, Ho, Wo)


def _resize3d_reference(x: jax.Array, size=(32, 32, 32)) -> jax.Array:
    """Independent gather+lerp reference (align_corners=True trilinear)."""
    def lerp_axis(a, axis, n_out):
        n_in = a.shape[axis]
        if n_out == 1 or n_in == 1:
            idx = jnp.zeros((n_out,), jnp.int32)
            return jnp.take(a, idx, axis=axis)
        src = jnp.arange(n_out, dtype=jnp.float32) * ((n_in - 1) / (n_out - 1))
        lo = jnp.clip(jnp.floor(src).astype(jnp.int32), 0, n_in - 1)
        hi = jnp.minimum(lo + 1, n_in - 1)
        w = src - lo.astype(jnp.float32)
        shp = [1] * a.ndim
        shp[axis] = n_out
        w = w.reshape(shp)
        return (jnp.take(a, lo, axis=axis) * (1.0 - w)
                + jnp.take(a, hi, axis=axis) * w)

    y = x.astype(jnp.float32)
    y = lerp_axis(y, 1, size[0])
    y = lerp_axis(y, 2, size[1])
    y = lerp_axis(y, 3, size[2])
    return y.astype(x.dtype)


if __name__ == "__main__":
    key = jax.random.PRNGKey(0)
    k1, k2 = jax.random.split(key)

    # (C, D, H, W) volume resized to the module default 32^3.
    # C=8, D=16 -> Cb=4 (Cb*D=64 MXU rows) and a 2-step parallel grid (v7x TCs).
    x = jax.random.normal(k1, (8, 16, 16, 16), dtype=jnp.float32)
    size = (32, 32, 32)
    y = jax.block_until_ready(resize3d(x, size))
    assert y.shape == (8, 32, 32, 32), y.shape
    assert y.dtype == x.dtype, (y.dtype, x.dtype)
    err = float(jnp.max(jnp.abs(y - _resize3d_reference(x, size))))
    assert err < 1e-4, f"max abs error vs reference: {err}"

    # Odd channel count + non-128-multiple output plane (exercises Cb=1 and the
    # lane-padding path) with mixed down/up-sampling per axis.
    x2 = jax.random.normal(k2, (3, 16, 16, 16), dtype=jnp.float32)
    size2 = (8, 12, 10)
    y2 = jax.block_until_ready(resize3d(x2, size2))
    assert y2.shape == (3, 8, 12, 10), y2.shape
    err2 = float(jnp.max(jnp.abs(y2 - _resize3d_reference(x2, size2))))
    assert err2 < 1e-4, f"max abs error vs reference (case 2): {err2}"

    print("KERNEL_OK")
</pallas_src>

<mosaic_0001>
module attributes {stable_mosaic.version = 11 : i64} {
  func.func @_resize3d_kernel(%arg0: i32, %arg1: memref<64x256xf32, #tpu.memory_space<vmem>>, %arg2: memref<256x1024xf32, #tpu.memory_space<vmem>>, %arg3: memref<128x64xf32, #tpu.memory_space<vmem>>, %arg4: memref<128x1024xf32, #tpu.memory_space<vmem>>, %arg5: memref<64x1024xf32, #tpu.memory_space<vmem>>) attributes {dimension_semantics = [#tpu.dimension_semantics<parallel>], iteration_bounds = array<i64: 2>, scalar_prefetch = 0 : i64, scratch_operands = 1 : i64, tpu.core_type = #tpu.core_type<tc>, window_params = [{transform_indices = @transform_0, window_bounds = array<i64: 64, 256>}, {pipeline_mode = #tpu.pipeline_mode<synchronous>, transform_indices = @transform_1, window_bounds = array<i64: 256, 1024>}, {pipeline_mode = #tpu.pipeline_mode<synchronous>, transform_indices = @transform_2, window_bounds = array<i64: 128, 64>}, {transform_indices = @transform_3, window_bounds = array<i64: 128, 1024>}]} {
    %c0 = arith.constant 0 : index
    %c0_0 = arith.constant 0 : index
    %0 = vector.load %arg1[%c0, %c0_0] : memref<64x256xf32, #tpu.memory_space<vmem>>, vector<64x256xf32>
    %c0_1 = arith.constant 0 : index
    %c0_2 = arith.constant 0 : index
    %1 = vector.load %arg2[%c0_1, %c0_2] : memref<256x1024xf32, #tpu.memory_space<vmem>>, vector<256x1024xf32>
    %cst = arith.constant dense<0.000000e+00> : vector<64x1024xf32>
    %2 = tpu.matmul %0, %1, %cst {dimension_numbers = #tpu.dot_dimension_numbers<[1], [0], [0], [1], [0, 0, 1, 1], [], []>} : vector<64x256xf32>, vector<256x1024xf32>, vector<64x1024xf32> -> vector<64x1024xf32>
    %c0_3 = arith.constant 0 : index
    %c0_4 = arith.constant 0 : index
    %3 = vector.load %arg5[%c0_3, %c0_4] : memref<64x1024xf32, #tpu.memory_space<vmem>>, vector<64x1024xf32>
    tpu.vector_store %arg5[%c0_3, %c0_4], %2 {strides = array<i32>} : memref<64x1024xf32, #tpu.memory_space<vmem>>, vector<64x1024xf32>,
    %c0_5 = arith.constant 0 : index
    %c0_6 = arith.constant 0 : index
    %4 = vector.load %arg3[%c0_5, %c0_6] : memref<128x64xf32, #tpu.memory_space<vmem>>, vector<128x64xf32>
    %c0_7 = arith.constant 0 : index
    %c0_8 = arith.constant 0 : index
    %5 = vector.load %arg5[%c0_7, %c0_8] : memref<64x1024xf32, #tpu.memory_space<vmem>>, vector<64x1024xf32>
    %cst_9 = arith.constant dense<0.000000e+00> : vector<128x1024xf32>
    %6 = tpu.matmul %4, %5, %cst_9 {dimension_numbers = #tpu.dot_dimension_numbers<[1], [0], [0], [1], [0, 0, 1, 1], [], []>} : vector<128x64xf32>, vector<64x1024xf32>, vector<128x1024xf32> -> vector<128x1024xf32>
    %c0_10 = arith.constant 0 : index
    %c0_11 = arith.constant 0 : index
    %7 = vector.load %arg4[%c0_10, %c0_11] : memref<128x1024xf32, #tpu.memory_space<vmem>>, vector<128x1024xf32>
    tpu.vector_store %arg4[%c0_10, %c0_11], %6 {strides = array<i32>} : memref<128x1024xf32, #tpu.memory_space<vmem>>, vector<128x1024xf32>,
    return
  }
  func.func @transform_0(%arg0: i32) -> (i32, i32) {
    %c0_i32 = arith.constant 0 : i32
    %c0_i32_0 = arith.constant 0 : i32
    return %arg0, %c0_i32 : i32, i32
  }
  func.func @transform_1(%arg0: i32) -> (i32, i32) {
    %c0_i32 = arith.constant 0 : i32
    %c0_i32_0 = arith.constant 0 : i32
    %c0_i32_1 = arith.constant 0 : i32
    return %c0_i32, %c0_i32_0 : i32, i32
  }
  func.func @transform_2(%arg0: i32) -> (i32, i32) {
    %c0_i32 = arith.constant 0 : i32
    %c0_i32_0 = arith.constant 0 : i32
    %c0_i32_1 = arith.constant 0 : i32
    return %c0_i32, %c0_i32_0 : i32, i32
  }
  func.func @transform_3(%arg0: i32) -> (i32, i32) {
    %c0_i32 = arith.constant 0 : i32
    %c0_i32_0 = arith.constant 0 : i32
    return %arg0, %c0_i32 : i32, i32
  }
}

</mosaic_0001>

<llo_original>
// kernel: tpu_custom_call.1
$region0: #{tpu_custom_call.1}
  #allocation0 [shape = 'u32[]', space=smem, size = 0x4, offset = 0x4, fixed_abs, tag = 'smem constant byte address 0x4 - core index']
  #allocation1 [shape = 'u32[72,128]{1,0:T(1,128)}', space=vmem, size = 0x9000, scoped, tag = 'internal scratch']
  #allocation2 [shape = 'f32[64,1024]{1,0:T(8,128)}', space=vmem, size = 0x40000, scoped, tag = 'scratch operand']
  %s0 = inlined_call_operand.hbm [shape: f32[128,256], index: 0, kind: input, shape index: {}]
  %s1 = inlined_call_operand.hbm [shape: f32[256,1024], index: 1, kind: input, shape index: {}]
  %s2 = inlined_call_operand.vmem [shape: f32[128,64], index: 2, kind: input, shape index: {}]
  %s3 = inlined_call_operand.hbm [shape: f32[256,1024], index: 3, kind: output, shape index: {}]
  %s4 = sld [smem:[#allocation0]]
  $region53: #{tpu_custom_call.1} parent=0
    _
  %s6 = ssub.s32 1, %s4
  %s7 = scalar_select 0, %s6, %s4
  $region1: #{tpu_custom_call.1} parent=0
    #allocation3 [shape = 'u8[131072]{0}', space=vmem, size = 0x20000, scoped, tag = 'input window, operand 0']
    #allocation4 [shape = 's32[2]{0}', space=sflag, size = 0x8, scoped, tag = 'scoped memory for tpu_custom_call.1']
    #allocation5 [shape = 's32[2]{0}', space=sflag, size = 0x8, scoped, tag = 'scoped memory for tpu_custom_call.1']
    #allocation6 [shape = 'u8[1048576]{0}', space=vmem, size = 0x100000, scoped, tag = 'input window, operand 1, single buffered']
    #allocation7 [shape = 's32[1]{0}', space=sflag, size = 0x4, scoped, tag = 'scoped memory for tpu_custom_call.1']
    #allocation8 [shape = 'u8[1048576]{0}', space=vmem, size = 0x100000, scoped, tag = 'output window, operand 0']
    %8 = vsyncpa [#allocation4], 0
    %s9 = scalar_lea.sflag [#allocation4], 1
    %10 = vsyncpa %s9, 0
    %11 = vsyncpa [#allocation7], 0
    %12 = vsyncpa [#allocation5], 0
    %s13 = scalar_lea.sflag [#allocation5], 1
    %14 = vsyncpa %s13, 0
    loop: start=0, step=1, limit=4
    $region2: #{tpu_custom_call.1} parent=1 // loop_pre_header
      _
    $region3: #{tpu_custom_call.1} parent=1 // loop_header
      %s16 = sphi 0, %s20
      %p17 = scmp.ge.s32.totalorder %s16, 4
      %s26 = sphi 0, %s28
      %s29 = sphi 0, %s26
      %s30 = sphi 0, %s29
      %s46 = sphi 0, %s30
      %s50 = sphi 0, %s50
      %s52 = sphi 0, %s50
      %s53 = sphi 0, %s52
      %s67 = sphi 0, %s53
      %s71 = sphi 0, %s71
      %s73 = sphi 0, %s71
      %s74 = sphi 0, %s73
      %s88 = sphi 0, %s74
      %s94 = sphi 0, %s96
      %s97 = sphi 0, %s94
      %s98 = sphi 0, %s97
      %s114 = sphi 0, %s98
    $region4: #{tpu_custom_call.1} parent=1 // loop_header_branch
      %19 = sbr.rel (%p17) target = $region8
    $region5: #{tpu_custom_call.1} parent=1 // loop_body
      %s21 = ssub.s32 %s16, 1
      %s22 = ssub.s32 %s16, 2
      %s23 = sadd.s32 %s16, 1
      %s24 = ssub.s32 %s16, %s23
      %p25 = scmp.eq.s32.totalorder %s24, 0
      %s27 = sadd.s32 %s26, 1
      %s28 = scalar_select %p25, %s26, %s27
      %p31 = pneg %p25
      %p32 = scmp.eq.s32.totalorder %s16, 1
      %p33 = por %p31, %p32
      %p34 = scmp.ne.s32.totalorder %s26, %s29
      %p35 = scmp.eq.s32.totalorder %s16, 0
      %p36 = por %p34, %p35
      %p37 = scmp.ne.s32.totalorder %s26, %s29
      %p38 = scmp.eq.s32.totalorder %s21, 1
      %p39 = por %p37, %p38
      %p40 = scmp.ne.s32.totalorder %s29, %s30
      %p41 = scmp.eq.s32.totalorder %s21, 0
      %p42 = por %p40, %p41
      %p43 = scmp.ne.s32.totalorder %s29, %s30
      %p44 = scmp.eq.s32.totalorder %s22, 1
      %p45 = por %p43, %p44
      %p47 = scmp.ne.s32.totalorder %s30, %s46
      %p48 = scmp.eq.s32.totalorder %s22, 0
      %p49 = por %p47, %p48
      %s51 = sadd.s32 %s50, 1
      %p54 = scmp.eq.s32.totalorder %s16, 1
      %p55 = scmp.ne.s32.totalorder %s50, %s52
      %p56 = scmp.eq.s32.totalorder %s16, 0
      %p57 = por %p55, %p56
      %p58 = scmp.ne.s32.totalorder %s50, %s52
      %p59 = scmp.eq.s32.totalorder %s21, 1
      %p60 = por %p58, %p59
      %p61 = scmp.ne.s32.totalorder %s52, %s53
      %p62 = scmp.eq.s32.totalorder %s21, 0
      %p63 = por %p61, %p62
      %p64 = scmp.ne.s32.totalorder %s52, %s53
      %p65 = scmp.eq.s32.totalorder %s22, 1
      %p66 = por %p64, %p65
      %p68 = scmp.ne.s32.totalorder %s53, %s67
      %p69 = scmp.eq.s32.totalorder %s22, 0
      %p70 = por %p68, %p69
      %s72 = sadd.s32 %s71, 1
      %p75 = scmp.eq.s32.totalorder %s16, 1
      %p76 = scmp.ne.s32.totalorder %s71, %s73
      %p77 = scmp.eq.s32.totalorder %s16, 0
      %p78 = por %p76, %p77
      %p79 = scmp.ne.s32.totalorder %s71, %s73
      %p80 = scmp.eq.s32.totalorder %s21, 1
      %p81 = por %p79, %p80
      %p82 = scmp.ne.s32.totalorder %s73, %s74
      %p83 = scmp.eq.s32.totalorder %s21, 0
      %p84 = por %p82, %p83
      %p85 = scmp.ne.s32.totalorder %s73, %s74
      %p86 = scmp.eq.s32.totalorder %s22, 1
      %p87 = por %p85, %p86
      %p89 = scmp.ne.s32.totalorder %s74, %s88
      %p90 = scmp.eq.s32.totalorder %s22, 0
      %p91 = por %p89, %p90
      %s92 = ssub.s32 %s16, %s23
      %p93 = scmp.eq.s32.totalorder %s92, 0
      %s95 = sadd.s32 %s94, 1
      %s96 = scalar_select %p93, %s94, %s95
      %p99 = pneg %p93
      %p100 = scmp.eq.s32.totalorder %s16, 1
      %p101 = por %p99, %p100
      %p102 = scmp.ne.s32.totalorder %s94, %s97
      %p103 = scmp.eq.s32.totalorder %s16, 0
      %p104 = por %p102, %p103
      %p105 = scmp.ne.s32.totalorder %s94, %s97
      %p106 = scmp.eq.s32.totalorder %s21, 1
      %p107 = por %p105, %p106
      %p108 = scmp.ne.s32.totalorder %s97, %s98
      %p109 = scmp.eq.s32.totalorder %s21, 0
      %p110 = por %p108, %p109
      %p111 = scmp.ne.s32.totalorder %s97, %s98
      %p112 = scmp.eq.s32.totalorder %s22, 1
      %p113 = por %p111, %p112
      %p115 = scmp.ne.s32.totalorder %s98, %s114
      %p116 = scmp.eq.s32.totalorder %s22, 0
      %p117 = por %p115, %p116
      %p118 = scmp.le.s32.totalorder 1, %s16
      %p119 = scmp.lt.s32.totalorder %s16, 3
      %p120 = pnand %p118, %p119
      %p121 = pneg %p120
      // Predicated region
      $region9: #{tpu_custom_call.1} parent=5 // pred_check
        _
      $region10: #{tpu_custom_call.1} parent=5 // pred_check_branch
        %123 = sbr.rel (%p120) target = $region12
      $region11: #{tpu_custom_call.1} parent=5 // pred_region
        %s124 = ssub.s32 %s16, 1
        // Predicated region
        $region13: #{tpu_custom_call.1} parent=11 // pred_check
          %p125 = pneg %p63
        $region14: #{tpu_custom_call.1} parent=11 // pred_check_branch
          %127 = sbr.rel (%p125) target = $region16
        $region15: #{tpu_custom_call.1} parent=11 // pred_region
          %129 = vsyncadd [#allocation7], 0
          %s130 = sshll.u32 %s1, 4
          %s131 = int_to_ptr.hbm [resolvable:$true] %s130
          %s132 = sshll.u32 [#allocation6], 4
          %s133 = int_to_ptr.vmem [resolvable:$true] %s132
          %138 = dma.hbm_to_vmem [thread:$0]  %s131, 32768, %s133, [#allocation7], 1024, 1024, 64
        $region16: #{tpu_custom_call.1} parent=11 // pred_fallthru
          _
        // Predicated region
        $region17: #{tpu_custom_call.1} parent=11 // pred_check
          %p139 = pneg %p84
        $region18: #{tpu_custom_call.1} parent=11 // pred_check_branch
          %141 = sbr.rel (%p139) target = $region20
        $region19: #{tpu_custom_call.1} parent=11 // pred_region
          _
        $region20: #{tpu_custom_call.1} parent=11 // pred_fallthru
          _
      $region12: #{tpu_custom_call.1} parent=5 // pred_fallthru
        _
      %p142 = scmp.lt.s32.totalorder %s16, 2
      // Predicated region
      $region21: #{tpu_custom_call.1} parent=5 // pred_check
        %p143 = pneg %p142
      $region22: #{tpu_custom_call.1} parent=5 // pred_check_branch
        %145 = sbr.rel (%p143) target = $region24
      $region23: #{tpu_custom_call.1} parent=5 // pred_region
        // Predicated region
        $region25: #{tpu_custom_call.1} parent=23 // pred_check
          %p146 = pneg %p36
        $region26: #{tpu_custom_call.1} parent=23 // pred_check_branch
          %148 = sbr.rel (%p146) target = $region28
        $region27: #{tpu_custom_call.1} parent=23 // pred_region
          %s149 = sand.u32 %s26, 1
          %s150 = scalar_lea.sflag [#allocation4], %s149
          %s151 = sand.u32 %s26, 1
          %s152 = smul.addr %s151, 128
          %s153 = scalar_lea.vmem [#allocation3], %s152
          %s154 = smul.u32 8, %s16
          %156 = vsyncadd %s150, 0
          %s157 = smul.addr %s154, 2
          %s158 = smul.addr %s157, 8
          %s159 = scalar_lea.hbm %s0, %s158
          %s160 = sshll.u32 %s159, 4
          %s161 = int_to_ptr.hbm [resolvable:$true] %s160
          %s162 = sshll.u32 %s153, 4
          %s163 = int_to_ptr.vmem [resolvable:$true] %s162
          %168 = dma.hbm_to_vmem [thread:$0]  %s161, 2048, %s163, %s150, 256, 256, 16
        $region28: #{tpu_custom_call.1} parent=23 // pred_fallthru
          _
      $region24: #{tpu_custom_call.1} parent=5 // pred_fallthru
        _
      %p169 = scmp.le.s32.totalorder 1, %s16
      %p170 = scmp.lt.s32.totalorder %s16, 3
      %p171 = pnand %p169, %p170
      %p172 = pneg %p171
      // Predicated region
      $region29: #{tpu_custom_call.1} parent=5 // pred_check
        _
      $region30: #{tpu_custom_call.1} parent=5 // pred_check_branch
        %174 = sbr.rel (%p171) target = $region32
      $region31: #{tpu_custom_call.1} parent=5 // pred_region
        %s175 = ssub.s32 %s16, 1
        %s176 = sand.u32 %s29, 1
        %s177 = scalar_lea.sflag [#allocation4], %s176
        %s178 = sand.u32 %s29, 1
        %s179 = smul.addr %s178, 128
        %s180 = scalar_lea.vmem [#allocation3], %s179
        // Predicated region
        $region33: #{tpu_custom_call.1} parent=31 // pred_check
          %p181 = pneg %p42
        $region34: #{tpu_custom_call.1} parent=31 // pred_check_branch
          %183 = sbr.rel (%p181) target = $region36
        $region35: #{tpu_custom_call.1} parent=31 // pred_region
          %185 = dma.done %s177, 2048
        $region36: #{tpu_custom_call.1} parent=31 // pred_fallthru
          _
        // Predicated region
        $region37: #{tpu_custom_call.1} parent=31 // pred_check
          %p186 = pneg %p63
        $region38: #{tpu_custom_call.1} parent=31 // pred_check_branch
          %188 = sbr.rel (%p186) target = $region40
        $region39: #{tpu_custom_call.1} parent=31 // pred_region
          %190 = dma.done [#allocation7], 32768
        $region40: #{tpu_custom_call.1} parent=31 // pred_fallthru
          _
        %s191 = sand.u32 %s29, 1
        %s192 = scalar_lea.sflag [#allocation4], %s191
        %s193 = sand.u32 %s29, 1
        %s194 = smul.addr %s193, 128
        %s195 = scalar_lea.vmem [#allocation3], %s194
        %p196 = pneg %p42
        %p197 = pneg %p39
        %p198 = pneg %p63
        %p199 = pneg %p60
        %p200 = pneg %p84
        %p201 = pneg %p81
        %p202 = pneg %p110
        %p203 = pneg %p107
        %s204 = sand.u32 %s97, 1
        %s205 = scalar_lea.sflag [#allocation5], %s204
        %s206 = sand.u32 %s97, 1
        %s207 = smul.addr %s206, 1024
        %s208 = scalar_lea.vmem [#allocation8], %s207
        %s209 = smul.u32 8, %s21
        %s210 = smul.u32 16, %s21
        %v211 = vld [vmem:[%s180] sm:$0xff]
        %v212 = vld [vmem:[%s180 + $0x8] sm:$0xff]
        %v213 = vld [vmem:[%s180 + $0x10] sm:$0xff]
        %v214 = vld [vmem:[%s180 + $0x18] sm:$0xff]
        %v215 = vld [vmem:[%s180 + $0x20] sm:$0xff]
        %v216 = vld [vmem:[%s180 + $0x28] sm:$0xff]
        %v217 = vld [vmem:[%s180 + $0x30] sm:$0xff]
        %v218 = vld [vmem:[%s180 + $0x38] sm:$0xff]
        %v219 = vld [vmem:[%s180 + $0x40] sm:$0xff]
        %v220 = vld [vmem:[%s180 + $0x48] sm:$0xff]
        %v221 = vld [vmem:[%s180 + $0x50] sm:$0xff]
        %v222 = vld [vmem:[%s180 + $0x58] sm:$0xff]
        %v223 = vld [vmem:[%s180 + $0x60] sm:$0xff]
        %v224 = vld [vmem:[%s180 + $0x68] sm:$0xff]
        %v225 = vld [vmem:[%s180 + $0x70] sm:$0xff]
        %v226 = vld [vmem:[%s180 + $0x78] sm:$0xff]
        %v227 = vld [vmem:[#allocation6] sm:$0xff]
        %v228 = vld [vmem:[#allocation6 + $0x8] sm:$0xff]
        %v229 = vld [vmem:[#allocation6 + $0x10] sm:$0xff]
        %v230 = vld [vmem:[#allocation6 + $0x18] sm:$0xff]
        %v231 = vld [vmem:[#allocation6 + $0x20] sm:$0xff]
        %v232 = vld [vmem:[#allocation6 + $0x28] sm:$0xff]
        %v233 = vld [vmem:[#allocation6 + $0x30] sm:$0xff]
        %v234 = vld [vmem:[#allocation6 + $0x38] sm:$0xff]
        %v235 = vld [vmem:[#allocation6 + $0x40] sm:$0xff]
        %v236 = vld [vmem:[#allocation6 + $0x48] sm:$0xff]
        %v237 = vld [vmem:[#allocation6 + $0x50] sm:$0xff]
        %v238 = vld [vmem:[#allocation6 + $0x58] sm:$0xff]
        %v239 = vld [vmem:[#allocation6 + $0x60] sm:$0xff]
        %v240 = vld [vmem:[#allocation6 + $0x68] sm:$0xff]
        %v241 = vld [vmem:[#allocation6 + $0x70] sm:$0xff]
        %v242 = vld [vmem:[#allocation6 + $0x78] sm:$0xff]
        %v243 = vld [vmem:[#allocation6 + $0x80] sm:$0xff]
        %v244 = vld [vmem:[#allocation6 + $0x88] sm:$0xff]
        %v245 = vld [vmem:[#allocation6 + $0x90] sm:$0xff]
        %v246 = vld [vmem:[#allocation6 + $0x98] sm:$0xff]
        %v247 = vld [vmem:[#allocation6 + $0xa0] sm:$0xff]
        %v248 = vld [vmem:[#allocation6 + $0xa8] sm:$0xff]
        %v249 = vld [vmem:[#allocation6 + $0xb0] sm:$0xff]
        %v250 = vld [vmem:[#allocation6 + $0xb8] sm:$0xff]
        %v251 = vld [vmem:[#allocation6 + $0xc0] sm:$0xff]
        %v252 = vld [vmem:[#allocation6 + $0xc8] sm:$0xff]
        %v253 = vld [vmem:[#allocation6 + $0xd0] sm:$0xff]
        %v254 = vld [vmem:[#allocation6 + $0xd8] sm:$0xff]
        %v255 = vld [vmem:[#allocation6 + $0xe0] sm:$0xff]
        %v256 = vld [vmem:[#allocation6 + $0xe8] sm:$0xff]
        %v257 = vld [vmem:[#allocation6 + $0xf0] sm:$0xff]
        %v258 = vld [vmem:[#allocation6 + $0xf8] sm:$0xff]
        %v259 = vld [vmem:[#allocation6 + $0x100] sm:$0xff]
        %v260 = vld [vmem:[#allocation6 + $0x108] sm:$0xff]
        %v261 = vld [vmem:[#allocation6 + $0x110] sm:$0xff]
        %v262 = vld [vmem:[#allocation6 + $0x118] sm:$0xff]
        %v263 = vld [vmem:[#allocation6 + $0x120] sm:$0xff]
        %v264 = vld [vmem:[#allocation6 + $0x128] sm:$0xff]
        %v265 = vld [vmem:[#allocation6 + $0x130] sm:$0xff]
        %v266 = vld [vmem:[#allocation6 + $0x138] sm:$0xff]
        %v267 = vld [vmem:[#allocation6 + $0x140] sm:$0xff]
        %v268 = vld [vmem:[#allocation6 + $0x148] sm:$0xff]
        %v269 = vld [vmem:[#allocation6 + $0x150] sm:$0xff]
        %v270 = vld [vmem:[#allocation6 + $0x158] sm:$0xff]
        %v271 = vld [vmem:[#allocation6 + $0x160] sm:$0xff]
        %v272 = vld [vmem:[#allocation6 + $0x168] sm:$0xff]
        %v273 = vld [vmem:[#allocation6 + $0x170] sm:$0xff]
        %v274 = vld [vmem:[#allocation6 + $0x178] sm:$0xff]
        %v275 = vld [vmem:[#allocation6 + $0x180] sm:$0xff]
        %v276 = vld [vmem:[#allocation6 + $0x188] sm:$0xff]
        %v277 = vld [vmem:[#allocation6 + $0x190] sm:$0xff]
        %v278 = vld [vmem:[#allocation6 + $0x198] sm:$0xff]
        %v279 = vld [vmem:[#allocation6 + $0x1a0] sm:$0xff]
        %v280 = vld [vmem:[#allocation6 + $0x1a8] sm:$0xff]
        %v281 = vld [vmem:[#allocation6 + $0x1b0] sm:$0xff]
        %v282 = vld [vmem:[#allocation6 + $0x1b8] sm:$0xff]
        %v283 = vld [vmem:[#allocation6 + $0x1c0] sm:$0xff]
        %v284 = vld [vmem:[#allocation6 + $0x1c8] sm:$0xff]
        %v285 = vld [vmem:[#allocation6 + $0x1d0] sm:$0xff]
        %v286 = vld [vmem:[#allocation6 + $0x1d8] sm:$0xff]
        %v287 = vld [vmem:[#allocation6 + $0x1e0] sm:$0xff]
        %v288 = vld [vmem:[#allocation6 + $0x1e8] sm:$0xff]
        %v289 = vld [vmem:[#allocation6 + $0x1f0] sm:$0xff]
        %v290 = vld [vmem:[#allocation6 + $0x1f8] sm:$0xff]
        %v291 = vld [vmem:[#allocation6 + $0x200] sm:$0xff]
        %v292 = vld [vmem:[#allocation6 + $0x208] sm:$0xff]
        %v293 = vld [vmem:[#allocation6 + $0x210] sm:$0xff]
        %v294 = vld [vmem:[#allocation6 + $0x218] sm:$0xff]
        %v295 = vld [vmem:[#allocation6 + $0x220] sm:$0xff]
        %v296 = vld [vmem:[#allocation6 + $0x228] sm:$0xff]
        %v297 = vld [vmem:[#allocation6 + $0x230] sm:$0xff]
        %v298 = vld [vmem:[#allocation6 + $0x238] sm:$0xff]
        %v299 = vld [vmem:[#allocation6 + $0x240] sm:$0xff]
        %v300 = vld [vmem:[#allocation6 + $0x248] sm:$0xff]
        %v301 = vld [vmem:[#allocation6 + $0x250] sm:$0xff]
        %v302 = vld [vmem:[#allocation6 + $0x258] sm:$0xff]
        %v303 = vld [vmem:[#allocation6 + $0x260] sm:$0xff]
        %v304 = vld [vmem:[#allocation6 + $0x268] sm:$0xff]
        %v305 = vld [vmem:[#allocation6 + $0x270] sm:$0xff]
        %v306 = vld [vmem:[#allocation6 + $0x278] sm:$0xff]
        %v307 = vld [vmem:[#allocation6 + $0x280] sm:$0xff]
        %v308 = vld [vmem:[#allocation6 + $0x288] sm:$0xff]
        %v309 = vld [vmem:[#allocation6 + $0x290] sm:$0xff]
        %v310 = vld [vmem:[#allocation6 + $0x298] sm:$0xff]
        %v311 = vld [vmem:[#allocation6 + $0x2a0] sm:$0xff]
        %v312 = vld [vmem:[#allocation6 + $0x2a8] sm:$0xff]
        %v313 = vld [vmem:[#allocation6 + $0x2b0] sm:$0xff]
        %v314 = vld [vmem:[#allocation6 + $0x2b8] sm:$0xff]
        %v315 = vld [vmem:[#allocation6 + $0x2c0] sm:$0xff]
        %v316 = vld [vmem:[#allocation6 + $0x2c8] sm:$0xff]
        %v317 = vld [vmem:[#allocation6 + $0x2d0] sm:$0xff]
        %v318 = vld [vmem:[#allocation6 + $0x2d8] sm:$0xff]
        %v319 = vld [vmem:[#allocation6 + $0x2e0] sm:$0xff]
        %v320 = vld [vmem:[#allocation6 + $0x2e8] sm:$0xff]
        %v321 = vld [vmem:[#allocation6 + $0x2f0] sm:$0xff]
        %v322 = vld [vmem:[#allocation6 + $0x2f8] sm:$0xff]
        %v323 = vld [vmem:[#allocation6 + $0x300] sm:$0xff]
        %v324 = vld [vmem:[#allocation6 + $0x308] sm:$0xff]
        %v325 = vld [vmem:[#allocation6 + $0x310] sm:$0xff]
        %v326 = vld [vmem:[#allocation6 + $0x318] sm:$0xff]
        %v327 = vld [vmem:[#allocation6 + $0x320] sm:$0xff]
        %v328 = vld [vmem:[#allocation6 + $0x328] sm:$0xff]
        %v329 = vld [vmem:[#allocation6 + $0x330] sm:$0xff]
        %v330 = vld [vmem:[#allocation6 + $0x338] sm:$0xff]
        %v331 = vld [vmem:[#allocation6 + $0x340] sm:$0xff]
        %v332 = vld [vmem:[#allocation6 + $0x348] sm:$0xff]
        %v333 = vld [vmem:[#allocation6 + $0x350] sm:$0xff]
        %v334 = vld [vmem:[#allocation6 + $0x358] sm:$0xff]
        %v335 = vld [vmem:[#allocation6 + $0x360] sm:$0xff]
        %v336 = vld [vmem:[#allocation6 + $0x368] sm:$0xff]
        %v337 = vld [vmem:[#allocation6 + $0x370] sm:$0xff]
        %v338 = vld [vmem:[#allocation6 + $0x378] sm:$0xff]
        %v339 = vld [vmem:[#allocation6 + $0x380] sm:$0xff]
        %v340 = vld [vmem:[#allocation6 + $0x388] sm:$0xff]
        %v341 = vld [vmem:[#allocation6 + $0x390] sm:$0xff]
        %v342 = vld [vmem:[#allocation6 + $0x398] sm:$0xff]
        %v343 = vld [vmem:[#allocation6 + $0x3a0] sm:$0xff]
        %v344 = vld [vmem:[#allocation6 + $0x3a8] sm:$0xff]
        %v345 = vld [vmem:[#allocation6 + $0x3b0] sm:$0xff]
        %v346 = vld [vmem:[#allocation6 + $0x3b8] sm:$0xff]
        %v347 = vld [vmem:[#allocation6 + $0x3c0] sm:$0xff]
        %v348 = vld [vmem:[#allocation6 + $0x3c8] sm:$0xff]
        %v349 = vld [vmem:[#allocation6 + $0x3d0] sm:$0xff]
        %v350 = vld [vmem:[#allocation6 + $0x3d8] sm:$0xff]
        %v351 = vld [vmem:[#allocation6 + $0x3e0] sm:$0xff]
        %v352 = vld [vmem:[#allocation6 + $0x3e8] sm:$0xff]
        %v353 = vld [vmem:[#allocation6 + $0x3f0] sm:$0xff]
        %v354 = vld [vmem:[#allocation6 + $0x3f8] sm:$0xff]
        %v355 = vld [vmem:[#allocation6 + $0x400] sm:$0xff]
        %v356 = vld [vmem:[#allocation6 + $0x408] sm:$0xff]
        %v357 = vld [vmem:[#allocation6 + $0x410] sm:$0xff]
        %v358 = vld [vmem:[#allocation6 + $0x418] sm:$0xff]
        %v359 = vld [vmem:[#allocation6 + $0x420] sm:$0xff]
        %v360 = vld [vmem:[#allocation6 + $0x428] sm:$0xff]
        %v361 = vld [vmem:[#allocation6 + $0x430] sm:$0xff]
        %v362 = vld [vmem:[#allocation6 + $0x438] sm:$0xff]
        %v363 = vld [vmem:[#allocation6 + $0x440] sm:$0xff]
        %v364 = vld [vmem:[#allocation6 + $0x448] sm:$0xff]
        %v365 = vld [vmem:[#allocation6 + $0x450] sm:$0xff]
        %v366 = vld [vmem:[#allocation6 + $0x458] sm:$0xff]
        %v367 = vld [vmem:[#allocation6 + $0x460] sm:$0xff]
        %v368 = vld [vmem:[#allocation6 + $0x468] sm:$0xff]
        %v369 = vld [vmem:[#allocation6 + $0x470] sm:$0xff]
        %v370 = vld [vmem:[#allocation6 + $0x478] sm:$0xff]
        %v371 = vld [vmem:[#allocation6 + $0x480] sm:$0xff]
        %v372 = vld [vmem:[#allocation6 + $0x488] sm:$0xff]
        %v373 = vld [vmem:[#allocation6 + $0x490] sm:$0xff]
        %v374 = vld [vmem:[#allocation6 + $0x498] sm:$0xff]
        %v375 = vld [vmem:[#allocation6 + $0x4a0] sm:$0xff]
        %v376 = vld [vmem:[#allocation6 + $0x4a8] sm:$0xff]
        %v377 = vld [vmem:[#allocation6 + $0x4b0] sm:$0xff]
        %v378 = vld [vmem:[#allocation6 + $0x4b8] sm:$0xff]
        %v379 = vld [vmem:[#allocation6 + $0x4c0] sm:$0xff]
        %v380 = vld [vmem:[#allocation6 + $0x4c8] sm:$0xff]
        %v381 = vld [vmem:[#allocation6 + $0x4d0] sm:$0xff]
        %v382 = vld [vmem:[#allocation6 + $0x4d8] sm:$0xff]
        %v383 = vld [vmem:[#allocation6 + $0x4e0] sm:$0xff]
        %v384 = vld [vmem:[#allocation6 + $0x4e8] sm:$0xff]
        %v385 = vld [vmem:[#allocation6 + $0x4f0] sm:$0xff]
        %v386 = vld [vmem:[#allocation6 + $0x4f8] sm:$0xff]
        %v387 = vld [vmem:[#allocation6 + $0x500] sm:$0xff]
        %v388 = vld [vmem:[#allocation6 + $0x508] sm:$0xff]
        %v389 = vld [vmem:[#allocation6 + $0x510] sm:$0xff]
        %v390 = vld [vmem:[#allocation6 + $0x518] sm:$0xff]
        %v391 = vld [vmem:[#allocation6 + $0x520] sm:$0xff]
        %v392 = vld [vmem:[#allocation6 + $0x528] sm:$0xff]
        %v393 = vld [vmem:[#allocation6 + $0x530] sm:$0xff]
        %v394 = vld [vmem:[#allocation6 + $0x538] sm:$0xff]
        %v395 = vld [vmem:[#allocation6 + $0x540] sm:$0xff]
        %v396 = vld [vmem:[#allocation6 + $0x548] sm:$0xff]
        %v397 = vld [vmem:[#allocation6 + $0x550] sm:$0xff]
        %v398 = vld [vmem:[#allocation6 + $0x558] sm:$0xff]
        %v399 = vld [vmem:[#allocation6 + $0x560] sm:$0xff]
        %v400 = vld [vmem:[#allocation6 + $0x568] sm:$0xff]
        %v401 = vld [vmem:[#allocation6 + $0x570] sm:$0xff]
        %v402 = vld [vmem:[#allocation6 + $0x578] sm:$0xff]
        %v403 = vld [vmem:[#allocation6 + $0x580] sm:$0xff]
        %v404 = vld [vmem:[#allocation6 + $0x588] sm:$0xff]
        %v405 = vld [vmem:[#allocation6 + $0x590] sm:$0xff]
        %v406 = vld [vmem:[#allocation6 + $0x598] sm:$0xff]
        %v407 = vld [vmem:[#allocation6 + $0x5a0] sm:$0xff]
        %v408 = vld [vmem:[#allocation6 + $0x5a8] sm:$0xff]
        %v409 = vld [vmem:[#allocation6 + $0x5b0] sm:$0xff]
        %v410 = vld [vmem:[#allocation6 + $0x5b8] sm:$0xff]
        %v411 = vld [vmem:[#allocation6 + $0x5c0] sm:$0xff]
        %v412 = vld [vmem:[#allocation6 + $0x5c8] sm:$0xff]
        %v413 = vld [vmem:[#allocation6 + $0x5d0] sm:$0xff]
        %v414 = vld [vmem:[#allocation6 + $0x5d8] sm:$0xff]
        %v415 = vld [vmem:[#allocation6 + $0x5e0] sm:$0xff]
        %v416 = vld [vmem:[#allocation6 + $0x5e8] sm:$0xff]
        %v417 = vld [vmem:[#allocation6 + $0x5f0] sm:$0xff]
        %v418 = vld [vmem:[#allocation6 + $0x5f8] sm:$0xff]
        %v419 = vld [vmem:[#allocation6 + $0x600] sm:$0xff]
        %v420 = vld [vmem:[#allocation6 + $0x608] sm:$0xff]
        %v421 = vld [vmem:[#allocation6 + $0x610] sm:$0xff]
        %v422 = vld [vmem:[#allocation6 + $0x618] sm:$0xff]
        %v423 = vld [vmem:[#allocation6 + $0x620] sm:$0xff]
        %v424 = vld [vmem:[#allocation6 + $0x628] sm:$0xff]
        %v425 = vld [vmem:[#allocation6 + $0x630] sm:$0xff]
        %v426 = vld [vmem:[#allocation6 + $0x638] sm:$0xff]
        %v427 = vld [vmem:[#allocation6 + $0x640] sm:$0xff]
        %v428 = vld [vmem:[#allocation6 + $0x648] sm:$0xff]
        %v429 = vld [vmem:[#allocation6 + $0x650] sm:$0xff]
        %v430 = vld [vmem:[#allocation6 + $0x658] sm:$0xff]
        %v431 = vld [vmem:[#allocation6 + $0x660] sm:$0xff]
        %v432 = vld [vmem:[#allocation6 + $0x668] sm:$0xff]
        %v433 = vld [vmem:[#allocation6 + $0x670] sm:$0xff]
        %v434 = vld [vmem:[#allocation6 + $0x678] sm:$0xff]
        %v435 = vld [vmem:[#allocation6 + $0x680] sm:$0xff]
        %v436 = vld [vmem:[#allocation6 + $0x688] sm:$0xff]
        %v437 = vld [vmem:[#allocation6 + $0x690] sm:$0xff]
        %v438 = vld [vmem:[#allocation6 + $0x698] sm:$0xff]
        %v439 = vld [vmem:[#allocation6 + $0x6a0] sm:$0xff]
        %v440 = vld [vmem:[#allocation6 + $0x6a8] sm:$0xff]
        %v441 = vld [vmem:[#allocation6 + $0x6b0] sm:$0xff]
        %v442 = vld [vmem:[#allocation6 + $0x6b8] sm:$0xff]
        %v443 = vld [vmem:[#allocation6 + $0x6c0] sm:$0xff]
        %v444 = vld [vmem:[#allocation6 + $0x6c8] sm:$0xff]
        %v445 = vld [vmem:[#allocation6 + $0x6d0] sm:$0xff]
        %v446 = vld [vmem:[#allocation6 + $0x6d8] sm:$0xff]
        %v447 = vld [vmem:[#allocation6 + $0x6e0] sm:$0xff]
        %v448 = vld [vmem:[#allocation6 + $0x6e8] sm:$0xff]
        %v449 = vld [vmem:[#allocation6 + $0x6f0] sm:$0xff]
        %v450 = vld [vmem:[#allocation6 + $0x6f8] sm:$0xff]
        %v451 = vld [vmem:[#allocation6 + $0x700] sm:$0xff]
        %v452 = vld [vmem:[#allocation6 + $0x708] sm:$0xff]
        %v453 = vld [vmem:[#allocation6 + $0x710] sm:$0xff]
        %v454 = vld [vmem:[#allocation6 + $0x718] sm:$0xff]
        %v455 = vld [vmem:[#allocation6 + $0x720] sm:$0xff]
        %v456 = vld [vmem:[#allocation6 + $0x728] sm:$0xff]
        %v457 = vld [vmem:[#allocation6 + $0x730] sm:$0xff]
        %v458 = vld [vmem:[#allocation6 + $0x738] sm:$0xff]
        %v459 = vld [vmem:[#allocation6 + $0x740] sm:$0xff]
        %v460 = vld [vmem:[#allocation6 + $0x748] sm:$0xff]
        %v461 = vld [vmem:[#allocation6 + $0x750] sm:$0xff]
        %v462 = vld [vmem:[#allocation6 + $0x758] sm:$0xff]
        %v463 = vld [vmem:[#allocation6 + $0x760] sm:$0xff]
        %v464 = vld [vmem:[#allocation6 + $0x768] sm:$0xff]
        %v465 = vld [vmem:[#allocation6 + $0x770] sm:$0xff]
        %v466 = vld [vmem:[#allocation6 + $0x778] sm:$0xff]
        %v467 = vld [vmem:[#allocation6 + $0x780] sm:$0xff]
        %v468 = vld [vmem:[#allocation6 + $0x788] sm:$0xff]
        %v469 = vld [vmem:[#allocation6 + $0x790] sm:$0xff]
        %v470 = vld [vmem:[#allocation6 + $0x798] sm:$0xff]
        %v471 = vld [vmem:[#allocation6 + $0x7a0] sm:$0xff]
        %v472 = vld [vmem:[#allocation6 + $0x7a8] sm:$0xff]
        %v473 = vld [vmem:[#allocation6 + $0x7b0] sm:$0xff]
        %v474 = vld [vmem:[#allocation6 + $0x7b8] sm:$0xff]
        %v475 = vld [vmem:[#allocation6 + $0x7c0] sm:$0xff]
        %v476 = vld [vmem:[#allocation6 + $0x7c8] sm:$0xff]
        %v477 = vld [vmem:[#allocation6 + $0x7d0] sm:$0xff]
        %v478 = vld [vmem:[#allocation6 + $0x7d8] sm:$0xff]
        %v479 = vld [vmem:[#allocation6 + $0x7e0] sm:$0xff]
        %v480 = vld [vmem:[#allocation6 + $0x7e8] sm:$0xff]
        %v481 = vld [vmem:[#allocation6 + $0x7f0] sm:$0xff]
        %v482 = vld [vmem:[#allocation6 + $0x7f8] sm:$0xff]
        %483 = vmatpush.msra.mxu0 %v347
        %484 = vmatpush.msra.mxu0 %v339
        %485 = vmatpush.msra.mxu0 %v331
        %486 = vmatpush.msra.mxu0 %v323
        %487 = vmatpush.msra.mxu0 %v315
        %488 = vmatpush.msra.mxu0 %v307
        %489 = vmatpush.msra.mxu0 %v299
        %490 = vmatpush.msra.mxu0 %v291
        %491 = vmatpush.msra.mxu0 %v283
        %492 = vmatpush.msra.mxu0 %v275
        %493 = vmatpush.msra.mxu0 %v267
        %494 = vmatpush.msra.mxu0 %v259
        %495 = vmatpush.msra.mxu0 %v251
        %496 = vmatpush.msra.mxu0 %v243
        %497 = vmatpush.msra.mxu0 %v235
        %498 = vmatpush.msra.mxu0 %v227
        %499 = vmatmul.f32.gmra.mxu0 %v211
        %v500 = vpop.f32.mrf.mxu0
        %v501 = vadd.f32 0.0, %v500
        %502 = vmatmul.f32.gmra.mxu0 %v213
        %v503 = vpop.f32.mrf.mxu0
        %v504 = vadd.f32 0.0, %v503
        %505 = vmatmul.f32.gmra.mxu0 %v215
        %v506 = vpop.f32.mrf.mxu0
        %v507 = vadd.f32 0.0, %v506
        %508 = vmatmul.f32.gmra.mxu0 %v217
        %v509 = vpop.f32.mrf.mxu0
        %v510 = vadd.f32 0.0, %v509
        %511 = vmatmul.f32.gmra.mxu0 %v219
        %v512 = vpop.f32.mrf.mxu0
        %v513 = vadd.f32 0.0, %v512
        %514 = vmatmul.f32.gmra.mxu0 %v221
        %v515 = vpop.f32.mrf.mxu0
        %v516 = vadd.f32 0.0, %v515
        %517 = vmatmul.f32.gmra.mxu0 %v223
        %v518 = vpop.f32.mrf.mxu0
        %v519 = vadd.f32 0.0, %v518
        %520 = vmatmul.f32.gmra.mxu0 %v225
        %v521 = vpop.f32.mrf.mxu0
        %v522 = vadd.f32 0.0, %v521
        %523 = vdwg.mxu0
        %524 = vmatpush.msra.mxu0 %v475
        %525 = vmatpush.msra.mxu0 %v467
        %526 = vmatpush.msra.mxu0 %v459
        %527 = vmatpush.msra.mxu0 %v451
        %528 = vmatpush.msra.mxu0 %v443
        %529 = vmatpush.msra.mxu0 %v435
        %530 = vmatpush.msra.mxu0 %v427
        %531 = vmatpush.msra.mxu0 %v419
        %532 = vmatpush.msra.mxu0 %v411
        %533 = vmatpush.msra.mxu0 %v403
        %534 = vmatpush.msra.mxu0 %v395
        %535 = vmatpush.msra.mxu0 %v387
        %536 = vmatpush.msra.mxu0 %v379
        %537 = vmatpush.msra.mxu0 %v371
        %538 = vmatpush.msra.mxu0 %v363
        %539 = vmatpush.msra.mxu0 %v355
        %540 = vmatmul.f32.gmra.mxu0 %v212
        %v541 = vpop.f32.mrf.mxu0
        %v542 = vadd.f32 %v501, %v541
        %543 = vmatmul.f32.gmra.mxu0 %v214
        %v544 = vpop.f32.mrf.mxu0
        %v545 = vadd.f32 %v504, %v544
        %546 = vmatmul.f32.gmra.mxu0 %v216
        %v547 = vpop.f32.mrf.mxu0
        %v548 = vadd.f32 %v507, %v547
        %549 = vmatmul.f32.gmra.mxu0 %v218
        %v550 = vpop.f32.mrf.mxu0
        %v551 = vadd.f32 %v510, %v550
        %552 = vmatmul.f32.gmra.mxu0 %v220
        %v553 = vpop.f32.mrf.mxu0
        %v554 = vadd.f32 %v513, %v553
        %555 = vmatmul.f32.gmra.mxu0 %v222
        %v556 = vpop.f32.mrf.mxu0
        %v557 = vadd.f32 %v516, %v556
        %558 = vmatmul.f32.gmra.mxu0 %v224
        %v559 = vpop.f32.mrf.mxu0
        %v560 = vadd.f32 %v519, %v559
        %561 = vmatmul.f32.gmra.mxu0 %v226
        %v562 = vpop.f32.mrf.mxu0
        %v563 = vadd.f32 %v522, %v562
        %564 = vdwg.mxu0
        %565 = vmatpush.msra.mxu0 %v348
        %566 = vmatpush.msra.mxu0 %v340
        %567 = vmatpush.msra.mxu0 %v332
        %568 = vmatpush.msra.mxu0 %v324
        %569 = vmatpush.msra.mxu0 %v316
        %570 = vmatpush.msra.mxu0 %v308
        %571 = vmatpush.msra.mxu0 %v300
        %572 = vmatpush.msra.mxu0 %v292
        %573 = vmatpush.msra.mxu0 %v284
        %574 = vmatpush.msra.mxu0 %v276
        %575 = vmatpush.msra.mxu0 %v268
        %576 = vmatpush.msra.mxu0 %v260
        %577 = vmatpush.msra.mxu0 %v252
        %578 = vmatpush.msra.mxu0 %v244
        %579 = vmatpush.msra.mxu0 %v236
        %580 = vmatpush.msra.mxu0 %v228
        %581 = vmatmul.f32.gmra.mxu0 %v211
        %v582 = vpop.f32.mrf.mxu0
        %v583 = vadd.f32 0.0, %v582
        %584 = vmatmul.f32.gmra.mxu0 %v213
        %v585 = vpop.f32.mrf.mxu0
        %v586 = vadd.f32 0.0, %v585
        %587 = vmatmul.f32.gmra.mxu0 %v215
        %v588 = vpop.f32.mrf.mxu0
        %v589 = vadd.f32 0.0, %v588
        %590 = vmatmul.f32.gmra.mxu0 %v217
        %v591 = vpop.f32.mrf.mxu0
        %v592 = vadd.f32 0.0, %v591
        %593 = vmatmul.f32.gmra.mxu0 %v219
        %v594 = vpop.f32.mrf.mxu0
        %v595 = vadd.f32 0.0, %v594
        %596 = vmatmul.f32.gmra.mxu0 %v221
        %v597 = vpop.f32.mrf.mxu0
        %v598 = vadd.f32 0.0, %v597
        %599 = vmatmul.f32.gmra.mxu0 %v223
        %v600 = vpop.f32.mrf.mxu0
        %v601 = vadd.f32 0.0, %v600
        %602 = vmatmul.f32.gmra.mxu0 %v225
        %v603 = vpop.f32.mrf.mxu0
        %v604 = vadd.f32 0.0, %v603
        %605 = vdwg.mxu0
        %606 = vmatpush.msra.mxu0 %v476
        %607 = vmatpush.msra.mxu0 %v468
        %608 = vmatpush.msra.mxu0 %v460
        %609 = vmatpush.msra.mxu0 %v452
        %610 = vmatpush.msra.mxu0 %v444
        %611 = vmatpush.msra.mxu0 %v436
        %612 = vmatpush.msra.mxu0 %v428
        %613 = vmatpush.msra.mxu0 %v420
        %614 = vmatpush.msra.mxu0 %v412
        %615 = vmatpush.msra.mxu0 %v404
        %616 = vmatpush.msra.mxu0 %v396
        %617 = vmatpush.msra.mxu0 %v388
        %618 = vmatpush.msra.mxu0 %v380
        %619 = vmatpush.msra.mxu0 %v372
        %620 = vmatpush.msra.mxu0 %v364
        %621 = vmatpush.msra.mxu0 %v356
        %622 = vmatmul.f32.gmra.mxu0 %v212
        %v623 = vpop.f32.mrf.mxu0
        %v624 = vadd.f32 %v583, %v623
        %625 = vmatmul.f32.gmra.mxu0 %v214
        %v626 = vpop.f32.mrf.mxu0
        %v627 = vadd.f32 %v586, %v626
        %628 = vmatmul.f32.gmra.mxu0 %v216
        %v629 = vpop.f32.mrf.mxu0
        %v630 = vadd.f32 %v589, %v629
        %631 = vmatmul.f32.gmra.mxu0 %v218
        %v632 = vpop.f32.mrf.mxu0
        %v633 = vadd.f32 %v592, %v632
        %634 = vmatmul.f32.gmra.mxu0 %v220
        %v635 = vpop.f32.mrf.mxu0
        %v636 = vadd.f32 %v595, %v635
        %637 = vmatmul.f32.gmra.mxu0 %v222
        %v638 = vpop.f32.mrf.mxu0
        %v639 = vadd.f32 %v598, %v638
        %640 = vmatmul.f32.gmra.mxu0 %v224
        %v641 = vpop.f32.mrf.mxu0
        %v642 = vadd.f32 %v601, %v641
        %643 = vmatmul.f32.gmra.mxu0 %v226
        %v644 = vpop.f32.mrf.mxu0
        %v645 = vadd.f32 %v604, %v644
        %646 = vdwg.mxu0
        %647 = vmatpush.msra.mxu0 %v349
        %648 = vmatpush.msra.mxu0 %v341
        %649 = vmatpush.msra.mxu0 %v333
        %650 = vmatpush.msra.mxu0 %v325
        %651 = vmatpush.msra.mxu0 %v317
        %652 = vmatpush.msra.mxu0 %v309
        %653 = vmatpush.msra.mxu0 %v301
        %654 = vmatpush.msra.mxu0 %v293
        %655 = vmatpush.msra.mxu0 %v285
        %656 = vmatpush.msra.mxu0 %v277
        %657 = vmatpush.msra.mxu0 %v269
        %658 = vmatpush.msra.mxu0 %v261
        %659 = vmatpush.msra.mxu0 %v253
        %660 = vmatpush.msra.mxu0 %v245
        %661 = vmatpush.msra.mxu0 %v237
        %662 = vmatpush.msra.mxu0 %v229
        %663 = vmatmul.f32.gmra.mxu0 %v211
        %v664 = vpop.f32.mrf.mxu0
        %v665 = vadd.f32 0.0, %v664
        %666 = vmatmul.f32.gmra.mxu0 %v213
        %v667 = vpop.f32.mrf.mxu0
        %v668 = vadd.f32 0.0, %v667
        %669 = vmatmul.f32.gmra.mxu0 %v215
        %v670 = vpop.f32.mrf.mxu0
        %v671 = vadd.f32 0.0, %v670
        %672 = vmatmul.f32.gmra.mxu0 %v217
        %v673 = vpop.f32.mrf.mxu0
        %v674 = vadd.f32 0.0, %v673
        %675 = vmatmul.f32.gmra.mxu0 %v219
        %v676 = vpop.f32.mrf.mxu0
        %v677 = vadd.f32 0.0, %v676
        %678 = vmatmul.f32.gmra.mxu0 %v221
        %v679 = vpop.f32.mrf.mxu0
        %v680 = vadd.f32 0.0, %v679
        %681 = vmatmul.f32.gmra.mxu0 %v223
        %v682 = vpop.f32.mrf.mxu0
        %v683 = vadd.f32 0.0, %v682
        %684 = vmatmul.f32.gmra.mxu0 %v225
        %v685 = vpop.f32.mrf.mxu0
        %v686 = vadd.f32 0.0, %v685
        %687 = vdwg.mxu0
        %688 = vmatpush.msra.mxu0 %v477
        %689 = vmatpush.msra.mxu0 %v469
        %690 = vmatpush.msra.mxu0 %v461
        %691 = vmatpush.msra.mxu0 %v453
        %692 = vmatpush.msra.mxu0 %v445
        %693 = vmatpush.msra.mxu0 %v437
        %694 = vmatpush.msra.mxu0 %v429
        %695 = vmatpush.msra.mxu0 %v421
        %696 = vmatpush.msra.mxu0 %v413
        %697 = vmatpush.msra.mxu0 %v405
        %698 = vmatpush.msra.mxu0 %v397
        %699 = vmatpush.msra.mxu0 %v389
        %700 = vmatpush.msra.mxu0 %v381
        %701 = vmatpush.msra.mxu0 %v373
        %702 = vmatpush.msra.mxu0 %v365
        %703 = vmatpush.msra.mxu0 %v357
        %704 = vmatmul.f32.gmra.mxu0 %v212
        %v705 = vpop.f32.mrf.mxu0
        %v706 = vadd.f32 %v665, %v705
        %707 = vmatmul.f32.gmra.mxu0 %v214
        %v708 = vpop.f32.mrf.mxu0
        %v709 = vadd.f32 %v668, %v708
        %710 = vmatmul.f32.gmra.mxu0 %v216
        %v711 = vpop.f32.mrf.mxu0
        %v712 = vadd.f32 %v671, %v711
        %713 = vmatmul.f32.gmra.mxu0 %v218
        %v714 = vpop.f32.mrf.mxu0
        %v715 = vadd.f32 %v674, %v714
        %716 = vmatmul.f32.gmra.mxu0 %v220
        %v717 = vpop.f32.mrf.mxu0
        %v718 = vadd.f32 %v677, %v717
        %719 = vmatmul.f32.gmra.mxu0 %v222
        %v720 = vpop.f32.mrf.mxu0
        %v721 = vadd.f32 %v680, %v720
        %722 = vmatmul.f32.gmra.mxu0 %v224
        %v723 = vpop.f32.mrf.mxu0
        %v724 = vadd.f32 %v683, %v723
        %725 = vmatmul.f32.gmra.mxu0 %v226
        %v726 = vpop.f32.mrf.mxu0
        %v727 = vadd.f32 %v686, %v726
        %728 = vdwg.mxu0
        %729 = vmatpush.msra.mxu0 %v350
        %730 = vmatpush.msra.mxu0 %v342
        %731 = vmatpush.msra.mxu0 %v334
        %732 = vmatpush.msra.mxu0 %v326
        %733 = vmatpush.msra.mxu0 %v318
        %734 = vmatpush.msra.mxu0 %v310
        %735 = vmatpush.msra.mxu0 %v302
        %736 = vmatpush.msra.mxu0 %v294
        %737 = vmatpush.msra.mxu0 %v286
        %738 = vmatpush.msra.mxu0 %v278
        %739 = vmatpush.msra.mxu0 %v270
        %740 = vmatpush.msra.mxu0 %v262
        %741 = vmatpush.msra.mxu0 %v254
        %742 = vmatpush.msra.mxu0 %v246
        %743 = vmatpush.msra.mxu0 %v238
        %744 = vmatpush.msra.mxu0 %v230
        %745 = vmatmul.f32.gmra.mxu0 %v211
        %v746 = vpop.f32.mrf.mxu0
        %v747 = vadd.f32 0.0, %v746
        %748 = vmatmul.f32.gmra.mxu0 %v213
        %v749 = vpop.f32.mrf.mxu0
        %v750 = vadd.f32 0.0, %v749
        %751 = vmatmul.f32.gmra.mxu0 %v215
        %v752 = vpop.f32.mrf.mxu0
        %v753 = vadd.f32 0.0, %v752
        %754 = vmatmul.f32.gmra.mxu0 %v217
        %v755 = vpop.f32.mrf.mxu0
        %v756 = vadd.f32 0.0, %v755
        %757 = vmatmul.f32.gmra.mxu0 %v219
        %v758 = vpop.f32.mrf.mxu0
        %v759 = vadd.f32 0.0, %v758
        %760 = vmatmul.f32.gmra.mxu0 %v221
        %v761 = vpop.f32.mrf.mxu0
        %v762 = vadd.f32 0.0, %v761
        %763 = vmatmul.f32.gmra.mxu0 %v223
        %v764 = vpop.f32.mrf.mxu0
        %v765 = vadd.f32 0.0, %v764
        %766 = vmatmul.f32.gmra.mxu0 %v225
        %v767 = vpop.f32.mrf.mxu0
        %v768 = vadd.f32 0.0, %v767
        %769 = vdwg.mxu0
        %770 = vmatpush.msra.mxu0 %v478
        %771 = vmatpush.msra.mxu0 %v470
        %772 = vmatpush.msra.mxu0 %v462
        %773 = vmatpush.msra.mxu0 %v454
        %774 = vmatpush.msra.mxu0 %v446
        %775 = vmatpush.msra.mxu0 %v438
        %776 = vmatpush.msra.mxu0 %v430
        %777 = vmatpush.msra.mxu0 %v422
        %778 = vmatpush.msra.mxu0 %v414
        %779 = vmatpush.msra.mxu0 %v406
        %780 = vmatpush.msra.mxu0 %v398
        %781 = vmatpush.msra.mxu0 %v390
        %782 = vmatpush.msra.mxu0 %v382
        %783 = vmatpush.msra.mxu0 %v374
        %784 = vmatpush.msra.mxu0 %v366
        %785 = vmatpush.msra.mxu0 %v358
        %786 = vmatmul.f32.gmra.mxu0 %v212
        %v787 = vpop.f32.mrf.mxu0
        %v788 = vadd.f32 %v747, %v787
        %789 = vmatmul.f32.gmra.mxu0 %v214
        %v790 = vpop.f32.mrf.mxu0
        %v791 = vadd.f32 %v750, %v790
        %792 = vmatmul.f32.gmra.mxu0 %v216
        %v793 = vpop.f32.mrf.mxu0
        %v794 = vadd.f32 %v753, %v793
        %795 = vmatmul.f32.gmra.mxu0 %v218
        %v796 = vpop.f32.mrf.mxu0
        %v797 = vadd.f32 %v756, %v796
        %798 = vmatmul.f32.gmra.mxu0 %v220
        %v799 = vpop.f32.mrf.mxu0
        %v800 = vadd.f32 %v759, %v799
        %801 = vmatmul.f32.gmra.mxu0 %v222
        %v802 = vpop.f32.mrf.mxu0
        %v803 = vadd.f32 %v762, %v802
        %804 = vmatmul.f32.gmra.mxu0 %v224
        %v805 = vpop.f32.mrf.mxu0
        %v806 = vadd.f32 %v765, %v805
        %807 = vmatmul.f32.gmra.mxu0 %v226
        %v808 = vpop.f32.mrf.mxu0
        %v809 = vadd.f32 %v768, %v808
        %810 = vdwg.mxu0
        %811 = vmatpush.msra.mxu0 %v351
        %812 = vmatpush.msra.mxu0 %v343
        %813 = vmatpush.msra.mxu0 %v335
        %814 = vmatpush.msra.mxu0 %v327
        %815 = vmatpush.msra.mxu0 %v319
        %816 = vmatpush.msra.mxu0 %v311
        %817 = vmatpush.msra.mxu0 %v303
        %818 = vmatpush.msra.mxu0 %v295
        %819 = vmatpush.msra.mxu0 %v287
        %820 = vmatpush.msra.mxu0 %v279
        %821 = vmatpush.msra.mxu0 %v271
        %822 = vmatpush.msra.mxu0 %v263
        %823 = vmatpush.msra.mxu0 %v255
        %824 = vmatpush.msra.mxu0 %v247
        %825 = vmatpush.msra.mxu0 %v239
        %826 = vmatpush.msra.mxu0 %v231
        %827 = vmatmul.f32.gmra.mxu0 %v211
        %v828 = vpop.f32.mrf.mxu0
        %v829 = vadd.f32 0.0, %v828
        %830 = vmatmul.f32.gmra.mxu0 %v213
        %v831 = vpop.f32.mrf.mxu0
        %v832 = vadd.f32 0.0, %v831
        %833 = vmatmul.f32.gmra.mxu0 %v215
        %v834 = vpop.f32.mrf.mxu0
        %v835 = vadd.f32 0.0, %v834
        %836 = vmatmul.f32.gmra.mxu0 %v217
        %v837 = vpop.f32.mrf.mxu0
        %v838 = vadd.f32 0.0, %v837
        %839 = vmatmul.f32.gmra.mxu0 %v219
        %v840 = vpop.f32.mrf.mxu0
        %v841 = vadd.f32 0.0, %v840
        %842 = vmatmul.f32.gmra.mxu0 %v221
        %v843 = vpop.f32.mrf.mxu0
        %v844 = vadd.f32 0.0, %v843
        %845 = vmatmul.f32.gmra.mxu0 %v223
        %v846 = vpop.f32.mrf.mxu0
        %v847 = vadd.f32 0.0, %v846
        %848 = vmatmul.f32.gmra.mxu0 %v225
        %v849 = vpop.f32.mrf.mxu0
        %v850 = vadd.f32 0.0, %v849
        %851 = vdwg.mxu0
        %852 = vmatpush.msra.mxu0 %v479
        %853 = vmatpush.msra.mxu0 %v471
        %854 = vmatpush.msra.mxu0 %v463
        %855 = vmatpush.msra.mxu0 %v455
        %856 = vmatpush.msra.mxu0 %v447
        %857 = vmatpush.msra.mxu0 %v439
        %858 = vmatpush.msra.mxu0 %v431
        %859 = vmatpush.msra.mxu0 %v423
        %860 = vmatpush.msra.mxu0 %v415
        %861 = vmatpush.msra.mxu0 %v407
        %862 = vmatpush.msra.mxu0 %v399
        %863 = vmatpush.msra.mxu0 %v391
        %864 = vmatpush.msra.mxu0 %v383
        %865 = vmatpush.msra.mxu0 %v375
        %866 = vmatpush.msra.mxu0 %v367
        %867 = vmatpush.msra.mxu0 %v359
        %868 = vmatmul.f32.gmra.mxu0 %v212
        %v869 = vpop.f32.mrf.mxu0
        %v870 = vadd.f32 %v829, %v869
        %871 = vmatmul.f32.gmra.mxu0 %v214
        %v872 = vpop.f32.mrf.mxu0
        %v873 = vadd.f32 %v832, %v872
        %874 = vmatmul.f32.gmra.mxu0 %v216
        %v875 = vpop.f32.mrf.mxu0
        %v876 = vadd.f32 %v835, %v875
        %877 = vmatmul.f32.gmra.mxu0 %v218
        %v878 = vpop.f32.mrf.mxu0
        %v879 = vadd.f32 %v838, %v878
        %880 = vmatmul.f32.gmra.mxu0 %v220
        %v881 = vpop.f32.mrf.mxu0
        %v882 = vadd.f32 %v841, %v881
        %883 = vmatmul.f32.gmra.mxu0 %v222
        %v884 = vpop.f32.mrf.mxu0
        %v885 = vadd.f32 %v844, %v884
        %886 = vmatmul.f32.gmra.mxu0 %v224
        %v887 = vpop.f32.mrf.mxu0
        %v888 = vadd.f32 %v847, %v887
        %889 = vmatmul.f32.gmra.mxu0 %v226
        %v890 = vpop.f32.mrf.mxu0
        %v891 = vadd.f32 %v850, %v890
        %892 = vdwg.mxu0
        %893 = vmatpush.msra.mxu0 %v352
        %894 = vmatpush.msra.mxu0 %v344
        %895 = vmatpush.msra.mxu0 %v336
        %896 = vmatpush.msra.mxu0 %v328
        %897 = vmatpush.msra.mxu0 %v320
        %898 = vmatpush.msra.mxu0 %v312
        %899 = vmatpush.msra.mxu0 %v304
        %900 = vmatpush.msra.mxu0 %v296
        %901 = vmatpush.msra.mxu0 %v288
        %902 = vmatpush.msra.mxu0 %v280
        %903 = vmatpush.msra.mxu0 %v272
        %904 = vmatpush.msra.mxu0 %v264
        %905 = vmatpush.msra.mxu0 %v256
        %906 = vmatpush.msra.mxu0 %v248
        %907 = vmatpush.msra.mxu0 %v240
        %908 = vmatpush.msra.mxu0 %v232
        %909 = vmatmul.f32.gmra.mxu0 %v211
        %v910 = vpop.f32.mrf.mxu0
        %v911 = vadd.f32 0.0, %v910
        %912 = vmatmul.f32.gmra.mxu0 %v213
        %v913 = vpop.f32.mrf.mxu0
        %v914 = vadd.f32 0.0, %v913
        %915 = vmatmul.f32.gmra.mxu0 %v215
        %v916 = vpop.f32.mrf.mxu0
        %v917 = vadd.f32 0.0, %v916
        %918 = vmatmul.f32.gmra.mxu0 %v217
        %v919 = vpop.f32.mrf.mxu0
        %v920 = vadd.f32 0.0, %v919
        %921 = vmatmul.f32.gmra.mxu0 %v219
        %v922 = vpop.f32.mrf.mxu0
        %v923 = vadd.f32 0.0, %v922
        %924 = vmatmul.f32.gmra.mxu0 %v221
        %v925 = vpop.f32.mrf.mxu0
        %v926 = vadd.f32 0.0, %v925
        %927 = vmatmul.f32.gmra.mxu0 %v223
        %v928 = vpop.f32.mrf.mxu0
        %v929 = vadd.f32 0.0, %v928
        %930 = vmatmul.f32.gmra.mxu0 %v225
        %v931 = vpop.f32.mrf.mxu0
        %v932 = vadd.f32 0.0, %v931
        %933 = vdwg.mxu0
        %934 = vmatpush.msra.mxu0 %v480
        %935 = vmatpush.msra.mxu0 %v472
        %936 = vmatpush.msra.mxu0 %v464
        %937 = vmatpush.msra.mxu0 %v456
        %938 = vmatpush.msra.mxu0 %v448
        %939 = vmatpush.msra.mxu0 %v440
        %940 = vmatpush.msra.mxu0 %v432
        %941 = vmatpush.msra.mxu0 %v424
        %942 = vmatpush.msra.mxu0 %v416
        %943 = vmatpush.msra.mxu0 %v408
        %944 = vmatpush.msra.mxu0 %v400
        %945 = vmatpush.msra.mxu0 %v392
        %946 = vmatpush.msra.mxu0 %v384
        %947 = vmatpush.msra.mxu0 %v376
        %948 = vmatpush.msra.mxu0 %v368
        %949 = vmatpush.msra.mxu0 %v360
        %950 = vmatmul.f32.gmra.mxu0 %v212
        %v951 = vpop.f32.mrf.mxu0
        %v952 = vadd.f32 %v911, %v951
        %953 = vmatmul.f32.gmra.mxu0 %v214
        %v954 = vpop.f32.mrf.mxu0
        %v955 = vadd.f32 %v914, %v954
        %956 = vmatmul.f32.gmra.mxu0 %v216
        %v957 = vpop.f32.mrf.mxu0
        %v958 = vadd.f32 %v917, %v957
        %959 = vmatmul.f32.gmra.mxu0 %v218
        %v960 = vpop.f32.mrf.mxu0
        %v961 = vadd.f32 %v920, %v960
        %962 = vmatmul.f32.gmra.mxu0 %v220
        %v963 = vpop.f32.mrf.mxu0
        %v964 = vadd.f32 %v923, %v963
        %965 = vmatmul.f32.gmra.mxu0 %v222
        %v966 = vpop.f32.mrf.mxu0
        %v967 = vadd.f32 %v926, %v966
        %968 = vmatmul.f32.gmra.mxu0 %v224
        %v969 = vpop.f32.mrf.mxu0
        %v970 = vadd.f32 %v929, %v969
        %971 = vmatmul.f32.gmra.mxu0 %v226
        %v972 = vpop.f32.mrf.mxu0
        %v973 = vadd.f32 %v932, %v972
        %974 = vdwg.mxu0
        %975 = vmatpush.msra.mxu0 %v353
        %976 = vmatpush.msra.mxu0 %v345
        %977 = vmatpush.msra.mxu0 %v337
        %978 = vmatpush.msra.mxu0 %v329
        %979 = vmatpush.msra.mxu0 %v321
        %980 = vmatpush.msra.mxu0 %v313
        %981 = vmatpush.msra.mxu0 %v305
        %982 = vmatpush.msra.mxu0 %v297
        %983 = vmatpush.msra.mxu0 %v289
        %984 = vmatpush.msra.mxu0 %v281
        %985 = vmatpush.msra.mxu0 %v273
        %986 = vmatpush.msra.mxu0 %v265
        %987 = vmatpush.msra.mxu0 %v257
        %988 = vmatpush.msra.mxu0 %v249
        %989 = vmatpush.msra.mxu0 %v241
        %990 = vmatpush.msra.mxu0 %v233
        %991 = vmatmul.f32.gmra.mxu0 %v211
        %v992 = vpop.f32.mrf.mxu0
        %v993 = vadd.f32 0.0, %v992
        %994 = vmatmul.f32.gmra.mxu0 %v213
        %v995 = vpop.f32.mrf.mxu0
        %v996 = vadd.f32 0.0, %v995
        %997 = vmatmul.f32.gmra.mxu0 %v215
        %v998 = vpop.f32.mrf.mxu0
        %v999 = vadd.f32 0.0, %v998
        %1000 = vmatmul.f32.gmra.mxu0 %v217
        %v1001 = vpop.f32.mrf.mxu0
        %v1002 = vadd.f32 0.0, %v1001
        %1003 = vmatmul.f32.gmra.mxu0 %v219
        %v1004 = vpop.f32.mrf.mxu0
        %v1005 = vadd.f32 0.0, %v1004
        %1006 = vmatmul.f32.gmra.mxu0 %v221
        %v1007 = vpop.f32.mrf.mxu0
        %v1008 = vadd.f32 0.0, %v1007
        %1009 = vmatmul.f32.gmra.mxu0 %v223
        %v1010 = vpop.f32.mrf.mxu0
        %v1011 = vadd.f32 0.0, %v1010
        %1012 = vmatmul.f32.gmra.mxu0 %v225
        %v1013 = vpop.f32.mrf.mxu0
        %v1014 = vadd.f32 0.0, %v1013
        %1015 = vdwg.mxu0
        %1016 = vmatpush.msra.mxu0 %v481
        %1017 = vmatpush.msra.mxu0 %v473
        %1018 = vmatpush.msra.mxu0 %v465
        %1019 = vmatpush.msra.mxu0 %v457
        %1020 = vmatpush.msra.mxu0 %v449
        %1021 = vmatpush.msra.mxu0 %v441
        %1022 = vmatpush.msra.mxu0 %v433
        %1023 = vmatpush.msra.mxu0 %v425
        %1024 = vmatpush.msra.mxu0 %v417
        %1025 = vmatpush.msra.mxu0 %v409
        %1026 = vmatpush.msra.mxu0 %v401
        %1027 = vmatpush.msra.mxu0 %v393
        %1028 = vmatpush.msra.mxu0 %v385
        %1029 = vmatpush.msra.mxu0 %v377
        %1030 = vmatpush.msra.mxu0 %v369
        %1031 = vmatpush.msra.mxu0 %v361
        %1032 = vmatmul.f32.gmra.mxu0 %v212
        %v1033 = vpop.f32.mrf.mxu0
        %v1034 = vadd.f32 %v993, %v1033
        %1035 = vmatmul.f32.gmra.mxu0 %v214
        %v1036 = vpop.f32.mrf.mxu0
        %v1037 = vadd.f32 %v996, %v1036
        %1038 = vmatmul.f32.gmra.mxu0 %v216
        %v1039 = vpop.f32.mrf.mxu0
        %v1040 = vadd.f32 %v999, %v1039
        %1041 = vmatmul.f32.gmra.mxu0 %v218
        %v1042 = vpop.f32.mrf.mxu0
        %v1043 = vadd.f32 %v1002, %v1042
        %1044 = vmatmul.f32.gmra.mxu0 %v220
        %v1045 = vpop.f32.mrf.mxu0
        %v1046 = vadd.f32 %v1005, %v1045
        %1047 = vmatmul.f32.gmra.mxu0 %v222
        %v1048 = vpop.f32.mrf.mxu0
        %v1049 = vadd.f32 %v1008, %v1048
        %1050 = vmatmul.f32.gmra.mxu0 %v224
        %v1051 = vpop.f32.mrf.mxu0
        %v1052 = vadd.f32 %v1011, %v1051
        %1053 = vmatmul.f32.gmra.mxu0 %v226
        %v1054 = vpop.f32.mrf.mxu0
        %v1055 = vadd.f32 %v1014, %v1054
        %1056 = vdwg.mxu0
        %1057 = vmatpush.msra.mxu0 %v354
        %1058 = vmatpush.msra.mxu0 %v346
        %1059 = vmatpush.msra.mxu0 %v338
        %1060 = vmatpush.msra.mxu0 %v330
        %1061 = vmatpush.msra.mxu0 %v322
        %1062 = vmatpush.msra.mxu0 %v314
        %1063 = vmatpush.msra.mxu0 %v306
        %1064 = vmatpush.msra.mxu0 %v298
        %1065 = vmatpush.msra.mxu0 %v290
        %1066 = vmatpush.msra.mxu0 %v282
        %1067 = vmatpush.msra.mxu0 %v274
        %1068 = vmatpush.msra.mxu0 %v266
        %1069 = vmatpush.msra.mxu0 %v258
        %1070 = vmatpush.msra.mxu0 %v250
        %1071 = vmatpush.msra.mxu0 %v242
        %1072 = vmatpush.msra.mxu0 %v234
        %1073 = vmatmul.f32.gmra.mxu0 %v211
        %v1074 = vpop.f32.mrf.mxu0
        %v1075 = vadd.f32 0.0, %v1074
        %1076 = vmatmul.f32.gmra.mxu0 %v213
        %v1077 = vpop.f32.mrf.mxu0
        %v1078 = vadd.f32 0.0, %v1077
        %1079 = vmatmul.f32.gmra.mxu0 %v215
        %v1080 = vpop.f32.mrf.mxu0
        %v1081 = vadd.f32 0.0, %v1080
        %1082 = vmatmul.f32.gmra.mxu0 %v217
        %v1083 = vpop.f32.mrf.mxu0
        %v1084 = vadd.f32 0.0, %v1083
        %1085 = vmatmul.f32.gmra.mxu0 %v219
        %v1086 = vpop.f32.mrf.mxu0
        %v1087 = vadd.f32 0.0, %v1086
        %1088 = vmatmul.f32.gmra.mxu0 %v221
        %v1089 = vpop.f32.mrf.mxu0
        %v1090 = vadd.f32 0.0, %v1089
        %1091 = vmatmul.f32.gmra.mxu0 %v223
        %v1092 = vpop.f32.mrf.mxu0
        %v1093 = vadd.f32 0.0, %v1092
        %1094 = vmatmul.f32.gmra.mxu0 %v225
        %v1095 = vpop.f32.mrf.mxu0
        %v1096 = vadd.f32 0.0, %v1095
        %1097 = vdwg.mxu0
        %1098 = vmatpush.msra.mxu0 %v482
        %1099 = vmatpush.msra.mxu0 %v474
        %1100 = vmatpush.msra.mxu0 %v466
        %1101 = vmatpush.msra.mxu0 %v458
        %1102 = vmatpush.msra.mxu0 %v450
        %1103 = vmatpush.msra.mxu0 %v442
        %1104 = vmatpush.msra.mxu0 %v434
        %1105 = vmatpush.msra.mxu0 %v426
        %1106 = vmatpush.msra.mxu0 %v418
        %1107 = vmatpush.msra.mxu0 %v410
        %1108 = vmatpush.msra.mxu0 %v402
        %1109 = vmatpush.msra.mxu0 %v394
        %1110 = vmatpush.msra.mxu0 %v386
        %1111 = vmatpush.msra.mxu0 %v378
        %1112 = vmatpush.msra.mxu0 %v370
        %1113 = vmatpush.msra.mxu0 %v362
        %1114 = vmatmul.f32.gmra.mxu0 %v212
        %v1115 = vpop.f32.mrf.mxu0
        %v1116 = vadd.f32 %v1075, %v1115
        %1117 = vmatmul.f32.gmra.mxu0 %v214
        %v1118 = vpop.f32.mrf.mxu0
        %v1119 = vadd.f32 %v1078, %v1118
        %1120 = vmatmul.f32.gmra.mxu0 %v216
        %v1121 = vpop.f32.mrf.mxu0
        %v1122 = vadd.f32 %v1081, %v1121
        %1123 = vmatmul.f32.gmra.mxu0 %v218
        %v1124 = vpop.f32.mrf.mxu0
        %v1125 = vadd.f32 %v1084, %v1124
        %1126 = vmatmul.f32.gmra.mxu0 %v220
        %v1127 = vpop.f32.mrf.mxu0
        %v1128 = vadd.f32 %v1087, %v1127
        %1129 = vmatmul.f32.gmra.mxu0 %v222
        %v1130 = vpop.f32.mrf.mxu0
        %v1131 = vadd.f32 %v1090, %v1130
        %1132 = vmatmul.f32.gmra.mxu0 %v224
        %v1133 = vpop.f32.mrf.mxu0
        %v1134 = vadd.f32 %v1093, %v1133
        %1135 = vmatmul.f32.gmra.mxu0 %v226
        %v1136 = vpop.f32.mrf.mxu0
        %v1137 = vadd.f32 %v1096, %v1136
        %1138 = vdwg.mxu0
        %1139 = vst [vmem:[#allocation2] sm:$0xff] %v542
        %1140 = vst [vmem:[#allocation2 + $0x8] sm:$0xff] %v624
        %1141 = vst [vmem:[#allocation2 + $0x10] sm:$0xff] %v706
        %1142 = vst [vmem:[#allocation2 + $0x18] sm:$0xff] %v788
        %1143 = vst [vmem:[#allocation2 + $0x20] sm:$0xff] %v870
        %1144 = vst [vmem:[#allocation2 + $0x28] sm:$0xff] %v952
        %1145 = vst [vmem:[#allocation2 + $0x30] sm:$0xff] %v1034
        %1146 = vst [vmem:[#allocation2 + $0x38] sm:$0xff] %v1116
        %1147 = vst [vmem:[#allocation2 + $0x40] sm:$0xff] %v545
        %1148 = vst [vmem:[#allocation2 + $0x48] sm:$0xff] %v627
        %1149 = vst [vmem:[#allocation2 + $0x50] sm:$0xff] %v709
        %1150 = vst [vmem:[#allocation2 + $0x58] sm:$0xff] %v791
        %1151 = vst [vmem:[#allocation2 + $0x60] sm:$0xff] %v873
        %1152 = vst [vmem:[#allocation2 + $0x68] sm:$0xff] %v955
        %1153 = vst [vmem:[#allocation2 + $0x70] sm:$0xff] %v1037
        %1154 = vst [vmem:[#allocation2 + $0x78] sm:$0xff] %v1119
        %1155 = vst [vmem:[#allocation2 + $0x80] sm:$0xff] %v548
        %1156 = vst [vmem:[#allocation2 + $0x88] sm:$0xff] %v630
        %1157 = vst [vmem:[#allocation2 + $0x90] sm:$0xff] %v712
        %1158 = vst [vmem:[#allocation2 + $0x98] sm:$0xff] %v794
        %1159 = vst [vmem:[#allocation2 + $0xa0] sm:$0xff] %v876
        %1160 = vst [vmem:[#allocation2 + $0xa8] sm:$0xff] %v958
        %1161 = vst [vmem:[#allocation2 + $0xb0] sm:$0xff] %v1040
        %1162 = vst [vmem:[#allocation2 + $0xb8] sm:$0xff] %v1122
        %1163 = vst [vmem:[#allocation2 + $0xc0] sm:$0xff] %v551
        %1164 = vst [vmem:[#allocation2 + $0xc8] sm:$0xff] %v633
        %1165 = vst [vmem:[#allocation2 + $0xd0] sm:$0xff] %v715
        %1166 = vst [vmem:[#allocation2 + $0xd8] sm:$0xff] %v797
        %1167 = vst [vmem:[#allocation2 + $0xe0] sm:$0xff] %v879
        %1168 = vst [vmem:[#allocation2 + $0xe8] sm:$0xff] %v961
        %1169 = vst [vmem:[#allocation2 + $0xf0] sm:$0xff] %v1043
        %1170 = vst [vmem:[#allocation2 + $0xf8] sm:$0xff] %v1125
        %1171 = vst [vmem:[#allocation2 + $0x100] sm:$0xff] %v554
        %1172 = vst [vmem:[#allocation2 + $0x108] sm:$0xff] %v636
        %1173 = vst [vmem:[#allocation2 + $0x110] sm:$0xff] %v718
        %1174 = vst [vmem:[#allocation2 + $0x118] sm:$0xff] %v800
        %1175 = vst [vmem:[#allocation2 + $0x120] sm:$0xff] %v882
        %1176 = vst [vmem:[#allocation2 + $0x128] sm:$0xff] %v964
        %1177 = vst [vmem:[#allocation2 + $0x130] sm:$0xff] %v1046
        %1178 = vst [vmem:[#allocation2 + $0x138] sm:$0xff] %v1128
        %1179 = vst [vmem:[#allocation2 + $0x140] sm:$0xff] %v557
        %1180 = vst [vmem:[#allocation2 + $0x148] sm:$0xff] %v639
        %1181 = vst [vmem:[#allocation2 + $0x150] sm:$0xff] %v721
        %1182 = vst [vmem:[#allocation2 + $0x158] sm:$0xff] %v803
        %1183 = vst [vmem:[#allocation2 + $0x160] sm:$0xff] %v885
        %1184 = vst [vmem:[#allocation2 + $0x168] sm:$0xff] %v967
        %1185 = vst [vmem:[#allocation2 + $0x170] sm:$0xff] %v1049
        %1186 = vst [vmem:[#allocation2 + $0x178] sm:$0xff] %v1131
        %1187 = vst [vmem:[#allocation2 + $0x180] sm:$0xff] %v560
        %1188 = vst [vmem:[#allocation2 + $0x188] sm:$0xff] %v642
        %1189 = vst [vmem:[#allocation2 + $0x190] sm:$0xff] %v724
        %1190 = vst [vmem:[#allocation2 + $0x198] sm:$0xff] %v806
        %1191 = vst [vmem:[#allocation2 + $0x1a0] sm:$0xff] %v888
        %1192 = vst [vmem:[#allocation2 + $0x1a8] sm:$0xff] %v970
        %1193 = vst [vmem:[#allocation2 + $0x1b0] sm:$0xff] %v1052
        %1194 = vst [vmem:[#allocation2 + $0x1b8] sm:$0xff] %v1134
        %1195 = vst [vmem:[#allocation2 + $0x1c0] sm:$0xff] %v563
        %1196 = vst [vmem:[#allocation2 + $0x1c8] sm:$0xff] %v645
        %1197 = vst [vmem:[#allocation2 + $0x1d0] sm:$0xff] %v727
        %1198 = vst [vmem:[#allocation2 + $0x1d8] sm:$0xff] %v809
        %1199 = vst [vmem:[#allocation2 + $0x1e0] sm:$0xff] %v891
        %1200 = vst [vmem:[#allocation2 + $0x1e8] sm:$0xff] %v973
        %1201 = vst [vmem:[#allocation2 + $0x1f0] sm:$0xff] %v1055
        %1202 = vst [vmem:[#allocation2 + $0x1f8] sm:$0xff] %v1137
        %v1203 = vld [vmem:[%s2] sm:$0xff]
        %v1204 = vld [vmem:[%s2 + $0x8] sm:$0xff]
        %v1205 = vld [vmem:[%s2 + $0x10] sm:$0xff]
        %v1206 = vld [vmem:[%s2 + $0x18] sm:$0xff]
        %v1207 = vld [vmem:[%s2 + $0x20] sm:$0xff]
        %v1208 = vld [vmem:[%s2 + $0x28] sm:$0xff]
        %v1209 = vld [vmem:[%s2 + $0x30] sm:$0xff]
        %v1210 = vld [vmem:[%s2 + $0x38] sm:$0xff]
        %v1211 = vld [vmem:[%s2 + $0x40] sm:$0xff]
        %v1212 = vld [vmem:[%s2 + $0x48] sm:$0xff]
        %v1213 = vld [vmem:[%s2 + $0x50] sm:$0xff]
        %v1214 = vld [vmem:[%s2 + $0x58] sm:$0xff]
        %v1215 = vld [vmem:[%s2 + $0x60] sm:$0xff]
        %v1216 = vld [vmem:[%s2 + $0x68] sm:$0xff]
        %v1217 = vld [vmem:[%s2 + $0x70] sm:$0xff]
        %v1218 = vld [vmem:[%s2 + $0x78] sm:$0xff]
        %v1219 = vld [vmem:[#allocation2] sm:$0xff]
        %v1220 = vld [vmem:[#allocation2 + $0x8] sm:$0xff]
        %v1221 = vld [vmem:[#allocation2 + $0x10] sm:$0xff]
        %v1222 = vld [vmem:[#allocation2 + $0x18] sm:$0xff]
        %v1223 = vld [vmem:[#allocation2 + $0x20] sm:$0xff]
        %v1224 = vld [vmem:[#allocation2 + $0x28] sm:$0xff]
        %v1225 = vld [vmem:[#allocation2 + $0x30] sm:$0xff]
        %v1226 = vld [vmem:[#allocation2 + $0x38] sm:$0xff]
        %v1227 = vld [vmem:[#allocation2 + $0x40] sm:$0xff]
        %v1228 = vld [vmem:[#allocation2 + $0x48] sm:$0xff]
        %v1229 = vld [vmem:[#allocation2 + $0x50] sm:$0xff]
        %v1230 = vld [vmem:[#allocation2 + $0x58] sm:$0xff]
        %v1231 = vld [vmem:[#allocation2 + $0x60] sm:$0xff]
        %v1232 = vld [vmem:[#allocation2 + $0x68] sm:$0xff]
        %v1233 = vld [vmem:[#allocation2 + $0x70] sm:$0xff]
        %v1234 = vld [vmem:[#allocation2 + $0x78] sm:$0xff]
        %v1235 = vld [vmem:[#allocation2 + $0x80] sm:$0xff]
        %v1236 = vld [vmem:[#allocation2 + $0x88] sm:$0xff]
        %v1237 = vld [vmem:[#allocation2 + $0x90] sm:$0xff]
        %v1238 = vld [vmem:[#allocation2 + $0x98] sm:$0xff]
        %v1239 = vld [vmem:[#allocation2 + $0xa0] sm:$0xff]
        %v1240 = vld [vmem:[#allocation2 + $0xa8] sm:$0xff]
        %v1241 = vld [vmem:[#allocation2 + $0xb0] sm:$0xff]
        %v1242 = vld [vmem:[#allocation2 + $0xb8] sm:$0xff]
        %v1243 = vld [vmem:[#allocation2 + $0xc0] sm:$0xff]
        %v1244 = vld [vmem:[#allocation2 + $0xc8] sm:$0xff]
        %v1245 = vld [vmem:[#allocation2 + $0xd0] sm:$0xff]
        %v1246 = vld [vmem:[#allocation2 + $0xd8] sm:$0xff]
        %v1247 = vld [vmem:[#allocation2 + $0xe0] sm:$0xff]
        %v1248 = vld [vmem:[#allocation2 + $0xe8] sm:$0xff]
        %v1249 = vld [vmem:[#allocation2 + $0xf0] sm:$0xff]
        %v1250 = vld [vmem:[#allocation2 + $0xf8] sm:$0xff]
        %v1251 = vld [vmem:[#allocation2 + $0x100] sm:$0xff]
        %v1252 = vld [vmem:[#allocation2 + $0x108] sm:$0xff]
        %v1253 = vld [vmem:[#allocation2 + $0x110] sm:$0xff]
        %v1254 = vld [vmem:[#allocation2 + $0x118] sm:$0xff]
        %v1255 = vld [vmem:[#allocation2 + $0x120] sm:$0xff]
        %v1256 = vld [vmem:[#allocation2 + $0x128] sm:$0xff]
        %v1257 = vld [vmem:[#allocation2 + $0x130] sm:$0xff]
        %v1258 = vld [vmem:[#allocation2 + $0x138] sm:$0xff]
        %v1259 = vld [vmem:[#allocation2 + $0x140] sm:$0xff]
        %v1260 = vld [vmem:[#allocation2 + $0x148] sm:$0xff]
        %v1261 = vld [vmem:[#allocation2 + $0x150] sm:$0xff]
        %v1262 = vld [vmem:[#allocation2 + $0x158] sm:$0xff]
        %v1263 = vld [vmem:[#allocation2 + $0x160] sm:$0xff]
        %v1264 = vld [vmem:[#allocation2 + $0x168] sm:$0xff]
        %v1265 = vld [vmem:[#allocation2 + $0x170] sm:$0xff]
        %v1266 = vld [vmem:[#allocation2 + $0x178] sm:$0xff]
        %v1267 = vld [vmem:[#allocation2 + $0x180] sm:$0xff]
        %v1268 = vld [vmem:[#allocation2 + $0x188] sm:$0xff]
        %v1269 = vld [vmem:[#allocation2 + $0x190] sm:$0xff]
        %v1270 = vld [vmem:[#allocation2 + $0x198] sm:$0xff]
        %v1271 = vld [vmem:[#allocation2 + $0x1a0] sm:$0xff]
        %v1272 = vld [vmem:[#allocation2 + $0x1a8] sm:$0xff]
        %v1273 = vld [vmem:[#allocation2 + $0x1b0] sm:$0xff]
        %v1274 = vld [vmem:[#allocation2 + $0x1b8] sm:$0xff]
        %v1275 = vld [vmem:[#allocation2 + $0x1c0] sm:$0xff]
        %v1276 = vld [vmem:[#allocation2 + $0x1c8] sm:$0xff]
        %v1277 = vld [vmem:[#allocation2 + $0x1d0] sm:$0xff]
        %v1278 = vld [vmem:[#allocation2 + $0x1d8] sm:$0xff]
        %v1279 = vld [vmem:[#allocation2 + $0x1e0] sm:$0xff]
        %v1280 = vld [vmem:[#allocation2 + $0x1e8] sm:$0xff]
        %v1281 = vld [vmem:[#allocation2 + $0x1f0] sm:$0xff]
        %v1282 = vld [vmem:[#allocation2 + $0x1f8] sm:$0xff]
        %vm1283 = vcmask 523264
        %v1285 = vsel %vm1283, %v1203, 0
        %v1288 = vsel %vm1283, %v1204, 0
        %v1291 = vsel %vm1283, %v1205, 0
        %v1294 = vsel %vm1283, %v1206, 0
        %v1297 = vsel %vm1283, %v1207, 0
        %v1300 = vsel %vm1283, %v1208, 0
        %v1303 = vsel %vm1283, %v1209, 0
        %v1306 = vsel %vm1283, %v1210, 0
        %v1309 = vsel %vm1283, %v1211, 0
        %v1312 = vsel %vm1283, %v1212, 0
        %v1315 = vsel %vm1283, %v1213, 0
        %v1318 = vsel %vm1283, %v1214, 0
        %v1321 = vsel %vm1283, %v1215, 0
        %v1324 = vsel %vm1283, %v1216, 0
        %v1327 = vsel %vm1283, %v1217, 0
        %v1330 = vsel %vm1283, %v1218, 0
        %1332 = vmatpush.msra.mxu0 0.0
        %1333 = vmatpush.msra.mxu0 0.0
        %1334 = vmatpush.msra.mxu0 0.0
        %1335 = vmatpush.msra.mxu0 0.0
        %1336 = vmatpush.msra.mxu0 0.0
        %1337 = vmatpush.msra.mxu0 0.0
        %1338 = vmatpush.msra.mxu0 0.0
        %1339 = vmatpush.msra.mxu0 0.0
        %1340 = vmatpush.msra.mxu0 %v1275
        %1341 = vmatpush.msra.mxu0 %v1267
        %1342 = vmatpush.msra.mxu0 %v1259
        %1343 = vmatpush.msra.mxu0 %v1251
        %1344 = vmatpush.msra.mxu0 %v1243
        %1345 = vmatpush.msra.mxu0 %v1235
        %1346 = vmatpush.msra.mxu0 %v1227
        %1347 = vmatpush.msra.mxu0 %v1219
        %1348 = vmatmul.f32.gmra.mxu0 %v1285
        %v1349 = vpop.f32.mrf.mxu0
        %v1350 = vadd.f32 0.0, %v1349
        %1351 = vmatmul.f32.gmra.mxu0 %v1288
        %v1352 = vpop.f32.mrf.mxu0
        %v1353 = vadd.f32 0.0, %v1352
        %1354 = vmatmul.f32.gmra.mxu0 %v1291
        %v1355 = vpop.f32.mrf.mxu0
        %v1356 = vadd.f32 0.0, %v1355
        %1357 = vmatmul.f32.gmra.mxu0 %v1294
        %v1358 = vpop.f32.mrf.mxu0
        %v1359 = vadd.f32 0.0, %v1358
        %1360 = vmatmul.f32.gmra.mxu0 %v1297
        %v1361 = vpop.f32.mrf.mxu0
        %v1362 = vadd.f32 0.0, %v1361
        %1363 = vmatmul.f32.gmra.mxu0 %v1300
        %v1364 = vpop.f32.mrf.mxu0
        %v1365 = vadd.f32 0.0, %v1364
        %1366 = vmatmul.f32.gmra.mxu0 %v1303
        %v1367 = vpop.f32.mrf.mxu0
        %v1368 = vadd.f32 0.0, %v1367
        %1369 = vmatmul.f32.gmra.mxu0 %v1306
        %v1370 = vpop.f32.mrf.mxu0
        %v1371 = vadd.f32 0.0, %v1370
        %1372 = vmatmul.f32.gmra.mxu0 %v1309
        %v1373 = vpop.f32.mrf.mxu0
        %v1374 = vadd.f32 0.0, %v1373
        %1375 = vmatmul.f32.gmra.mxu0 %v1312
        %v1376 = vpop.f32.mrf.mxu0
        %v1377 = vadd.f32 0.0, %v1376
        %1378 = vmatmul.f32.gmra.mxu0 %v1315
        %v1379 = vpop.f32.mrf.mxu0
        %v1380 = vadd.f32 0.0, %v1379
        %1381 = vmatmul.f32.gmra.mxu0 %v1318
        %v1382 = vpop.f32.mrf.mxu0
        %v1383 = vadd.f32 0.0, %v1382
        %1384 = vmatmul.f32.gmra.mxu0 %v1321
        %v1385 = vpop.f32.mrf.mxu0
        %v1386 = vadd.f32 0.0, %v1385
        %1387 = vmatmul.f32.gmra.mxu0 %v1324
        %v1388 = vpop.f32.mrf.mxu0
        %v1389 = vadd.f32 0.0, %v1388
        %1390 = vmatmul.f32.gmra.mxu0 %v1327
        %v1391 = vpop.f32.mrf.mxu0
        %v1392 = vadd.f32 0.0, %v1391
        %1393 = vmatmul.f32.gmra.mxu0 %v1330
        %v1394 = vpop.f32.mrf.mxu0
        %v1395 = vadd.f32 0.0, %v1394
        %1396 = vdwg.mxu0
        %1397 = vmatpush.msra.mxu0 0.0
        %1398 = vmatpush.msra.mxu0 0.0
        %1399 = vmatpush.msra.mxu0 0.0
        %1400 = vmatpush.msra.mxu0 0.0
        %1401 = vmatpush.msra.mxu0 0.0
        %1402 = vmatpush.msra.mxu0 0.0
        %1403 = vmatpush.msra.mxu0 0.0
        %1404 = vmatpush.msra.mxu0 0.0
        %1405 = vmatpush.msra.mxu0 %v1276
        %1406 = vmatpush.msra.mxu0 %v1268
        %1407 = vmatpush.msra.mxu0 %v1260
        %1408 = vmatpush.msra.mxu0 %v1252
        %1409 = vmatpush.msra.mxu0 %v1244
        %1410 = vmatpush.msra.mxu0 %v1236
        %1411 = vmatpush.msra.mxu0 %v1228
        %1412 = vmatpush.msra.mxu0 %v1220
        %1413 = vmatmul.f32.gmra.mxu0 %v1285
        %v1414 = vpop.f32.mrf.mxu0
        %v1415 = vadd.f32 0.0, %v1414
        %1416 = vmatmul.f32.gmra.mxu0 %v1288
        %v1417 = vpop.f32.mrf.mxu0
        %v1418 = vadd.f32 0.0, %v1417
        %1419 = vmatmul.f32.gmra.mxu0 %v1291
        %v1420 = vpop.f32.mrf.mxu0
        %v1421 = vadd.f32 0.0, %v1420
        %1422 = vmatmul.f32.gmra.mxu0 %v1294
        %v1423 = vpop.f32.mrf.mxu0
        %v1424 = vadd.f32 0.0, %v1423
        %1425 = vmatmul.f32.gmra.mxu0 %v1297
        %v1426 = vpop.f32.mrf.mxu0
        %v1427 = vadd.f32 0.0, %v1426
        %1428 = vmatmul.f32.gmra.mxu0 %v1300
        %v1429 = vpop.f32.mrf.mxu0
        %v1430 = vadd.f32 0.0, %v1429
        %1431 = vmatmul.f32.gmra.mxu0 %v1303
        %v1432 = vpop.f32.mrf.mxu0
        %v1433 = vadd.f32 0.0, %v1432
        %1434 = vmatmul.f32.gmra.mxu0 %v1306
        %v1435 = vpop.f32.mrf.mxu0
        %v1436 = vadd.f32 0.0, %v1435
        %1437 = vmatmul.f32.gmra.mxu0 %v1309
        %v1438 = vpop.f32.mrf.mxu0
        %v1439 = vadd.f32 0.0, %v1438
        %1440 = vmatmul.f32.gmra.mxu0 %v1312
        %v1441 = vpop.f32.mrf.mxu0
        %v1442 = vadd.f32 0.0, %v1441
        %1443 = vmatmul.f32.gmra.mxu0 %v1315
        %v1444 = vpop.f32.mrf.mxu0
        %v1445 = vadd.f32 0.0, %v1444
        %1446 = vmatmul.f32.gmra.mxu0 %v1318
        %v1447 = vpop.f32.mrf.mxu0
        %v1448 = vadd.f32 0.0, %v1447
        %1449 = vmatmul.f32.gmra.mxu0 %v1321
        %v1450 = vpop.f32.mrf.mxu0
        %v1451 = vadd.f32 0.0, %v1450
        %1452 = vmatmul.f32.gmra.mxu0 %v1324
        %v1453 = vpop.f32.mrf.mxu0
        %v1454 = vadd.f32 0.0, %v1453
        %1455 = vmatmul.f32.gmra.mxu0 %v1327
        %v1456 = vpop.f32.mrf.mxu0
        %v1457 = vadd.f32 0.0, %v1456
        %1458 = vmatmul.f32.gmra.mxu0 %v1330
        %v1459 = vpop.f32.mrf.mxu0
        %v1460 = vadd.f32 0.0, %v1459
        %1461 = vdwg.mxu0
        %1462 = vmatpush.msra.mxu0 0.0
        %1463 = vmatpush.msra.mxu0 0.0
        %1464 = vmatpush.msra.mxu0 0.0
        %1465 = vmatpush.msra.mxu0 0.0
        %1466 = vmatpush.msra.mxu0 0.0
        %1467 = vmatpush.msra.mxu0 0.0
        %1468 = vmatpush.msra.mxu0 0.0
        %1469 = vmatpush.msra.mxu0 0.0
        %1470 = vmatpush.msra.mxu0 %v1277
        %1471 = vmatpush.msra.mxu0 %v1269
        %1472 = vmatpush.msra.mxu0 %v1261
        %1473 = vmatpush.msra.mxu0 %v1253
        %1474 = vmatpush.msra.mxu0 %v1245
        %1475 = vmatpush.msra.mxu0 %v1237
        %1476 = vmatpush.msra.mxu0 %v1229
        %1477 = vmatpush.msra.mxu0 %v1221
        %1478 = vmatmul.f32.gmra.mxu0 %v1285
        %v1479 = vpop.f32.mrf.mxu0
        %v1480 = vadd.f32 0.0, %v1479
        %1481 = vmatmul.f32.gmra.mxu0 %v1288
        %v1482 = vpop.f32.mrf.mxu0
        %v1483 = vadd.f32 0.0, %v1482
        %1484 = vmatmul.f32.gmra.mxu0 %v1291
        %v1485 = vpop.f32.mrf.mxu0
        %v1486 = vadd.f32 0.0, %v1485
        %1487 = vmatmul.f32.gmra.mxu0 %v1294
        %v1488 = vpop.f32.mrf.mxu0
        %v1489 = vadd.f32 0.0, %v1488
        %1490 = vmatmul.f32.gmra.mxu0 %v1297
        %v1491 = vpop.f32.mrf.mxu0
        %v1492 = vadd.f32 0.0, %v1491
        %1493 = vmatmul.f32.gmra.mxu0 %v1300
        %v1494 = vpop.f32.mrf.mxu0
        %v1495 = vadd.f32 0.0, %v1494
        %1496 = vmatmul.f32.gmra.mxu0 %v1303
        %v1497 = vpop.f32.mrf.mxu0
        %v1498 = vadd.f32 0.0, %v1497
        %1499 = vmatmul.f32.gmra.mxu0 %v1306
        %v1500 = vpop.f32.mrf.mxu0
        %v1501 = vadd.f32 0.0, %v1500
        %1502 = vmatmul.f32.gmra.mxu0 %v1309
        %v1503 = vpop.f32.mrf.mxu0
        %v1504 = vadd.f32 0.0, %v1503
        %1505 = vmatmul.f32.gmra.mxu0 %v1312
        %v1506 = vpop.f32.mrf.mxu0
        %v1507 = vadd.f32 0.0, %v1506
        %1508 = vmatmul.f32.gmra.mxu0 %v1315
        %v1509 = vpop.f32.mrf.mxu0
        %v1510 = vadd.f32 0.0, %v1509
        %1511 = vmatmul.f32.gmra.mxu0 %v1318
        %v1512 = vpop.f32.mrf.mxu0
        %v1513 = vadd.f32 0.0, %v1512
        %1514 = vmatmul.f32.gmra.mxu0 %v1321
        %v1515 = vpop.f32.mrf.mxu0
        %v1516 = vadd.f32 0.0, %v1515
        %1517 = vmatmul.f32.gmra.mxu0 %v1324
        %v1518 = vpop.f32.mrf.mxu0
        %v1519 = vadd.f32 0.0, %v1518
        %1520 = vmatmul.f32.gmra.mxu0 %v1327
        %v1521 = vpop.f32.mrf.mxu0
        %v1522 = vadd.f32 0.0, %v1521
        %1523 = vmatmul.f32.gmra.mxu0 %v1330
        %v1524 = vpop.f32.mrf.mxu0
        %v1525 = vadd.f32 0.0, %v1524
        %1526 = vdwg.mxu0
        %1527 = vmatpush.msra.mxu0 0.0
        %1528 = vmatpush.msra.mxu0 0.0
        %1529 = vmatpush.msra.mxu0 0.0
        %1530 = vmatpush.msra.mxu0 0.0
        %1531 = vmatpush.msra.mxu0 0.0
        %1532 = vmatpush.msra.mxu0 0.0
        %1533 = vmatpush.msra.mxu0 0.0
        %1534 = vmatpush.msra.mxu0 0.0
        %1535 = vmatpush.msra.mxu0 %v1278
        %1536 = vmatpush.msra.mxu0 %v1270
        %1537 = vmatpush.msra.mxu0 %v1262
        %1538 = vmatpush.msra.mxu0 %v1254
        %1539 = vmatpush.msra.mxu0 %v1246
        %1540 = vmatpush.msra.mxu0 %v1238
        %1541 = vmatpush.msra.mxu0 %v1230
        %1542 = vmatpush.msra.mxu0 %v1222
        %1543 = vmatmul.f32.gmra.mxu0 %v1285
        %v1544 = vpop.f32.mrf.mxu0
        %v1545 = vadd.f32 0.0, %v1544
        %1546 = vmatmul.f32.gmra.mxu0 %v1288
        %v1547 = vpop.f32.mrf.mxu0
        %v1548 = vadd.f32 0.0, %v1547
        %1549 = vmatmul.f32.gmra.mxu0 %v1291
        %v1550 = vpop.f32.mrf.mxu0
        %v1551 = vadd.f32 0.0, %v1550
        %1552 = vmatmul.f32.gmra.mxu0 %v1294
        %v1553 = vpop.f32.mrf.mxu0
        %v1554 = vadd.f32 0.0, %v1553
        %1555 = vmatmul.f32.gmra.mxu0 %v1297
        %v1556 = vpop.f32.mrf.mxu0
        %v1557 = vadd.f32 0.0, %v1556
        %1558 = vmatmul.f32.gmra.mxu0 %v1300
        %v1559 = vpop.f32.mrf.mxu0
        %v1560 = vadd.f32 0.0, %v1559
        %1561 = vmatmul.f32.gmra.mxu0 %v1303
        %v1562 = vpop.f32.mrf.mxu0
        %v1563 = vadd.f32 0.0, %v1562
        %1564 = vmatmul.f32.gmra.mxu0 %v1306
        %v1565 = vpop.f32.mrf.mxu0
        %v1566 = vadd.f32 0.0, %v1565
        %1567 = vmatmul.f32.gmra.mxu0 %v1309
        %v1568 = vpop.f32.mrf.mxu0
        %v1569 = vadd.f32 0.0, %v1568
        %1570 = vmatmul.f32.gmra.mxu0 %v1312
        %v1571 = vpop.f32.mrf.mxu0
        %v1572 = vadd.f32 0.0, %v1571
        %1573 = vmatmul.f32.gmra.mxu0 %v1315
        %v1574 = vpop.f32.mrf.mxu0
        %v1575 = vadd.f32 0.0, %v1574
        %1576 = vmatmul.f32.gmra.mxu0 %v1318
        %v1577 = vpop.f32.mrf.mxu0
        %v1578 = vadd.f32 0.0, %v1577
        %1579 = vmatmul.f32.gmra.mxu0 %v1321
        %v1580 = vpop.f32.mrf.mxu0
        %v1581 = vadd.f32 0.0, %v1580
        %1582 = vmatmul.f32.gmra.mxu0 %v1324
        %v1583 = vpop.f32.mrf.mxu0
        %v1584 = vadd.f32 0.0, %v1583
        %1585 = vmatmul.f32.gmra.mxu0 %v1327
        %v1586 = vpop.f32.mrf.mxu0
        %v1587 = vadd.f32 0.0, %v1586
        %1588 = vmatmul.f32.gmra.mxu0 %v1330
        %v1589 = vpop.f32.mrf.mxu0
        %v1590 = vadd.f32 0.0, %v1589
        %1591 = vdwg.mxu0
        %1592 = vmatpush.msra.mxu0 0.0
        %1593 = vmatpush.msra.mxu0 0.0
        %1594 = vmatpush.msra.mxu0 0.0
        %1595 = vmatpush.msra.mxu0 0.0
        %1596 = vmatpush.msra.mxu0 0.0
        %1597 = vmatpush.msra.mxu0 0.0
        %1598 = vmatpush.msra.mxu0 0.0
        %1599 = vmatpush.msra.mxu0 0.0
        %1600 = vmatpush.msra.mxu0 %v1279
        %1601 = vmatpush.msra.mxu0 %v1271
        %1602 = vmatpush.msra.mxu0 %v1263
        %1603 = vmatpush.msra.mxu0 %v1255
        %1604 = vmatpush.msra.mxu0 %v1247
        %1605 = vmatpush.msra.mxu0 %v1239
        %1606 = vmatpush.msra.mxu0 %v1231
        %1607 = vmatpush.msra.mxu0 %v1223
        %1608 = vmatmul.f32.gmra.mxu0 %v1285
        %v1609 = vpop.f32.mrf.mxu0
        %v1610 = vadd.f32 0.0, %v1609
        %1611 = vmatmul.f32.gmra.mxu0 %v1288
        %v1612 = vpop.f32.mrf.mxu0
        %v1613 = vadd.f32 0.0, %v1612
        %1614 = vmatmul.f32.gmra.mxu0 %v1291
        %v1615 = vpop.f32.mrf.mxu0
        %v1616 = vadd.f32 0.0, %v1615
        %1617 = vmatmul.f32.gmra.mxu0 %v1294
        %v1618 = vpop.f32.mrf.mxu0
        %v1619 = vadd.f32 0.0, %v1618
        %1620 = vmatmul.f32.gmra.mxu0 %v1297
        %v1621 = vpop.f32.mrf.mxu0
        %v1622 = vadd.f32 0.0, %v1621
        %1623 = vmatmul.f32.gmra.mxu0 %v1300
        %v1624 = vpop.f32.mrf.mxu0
        %v1625 = vadd.f32 0.0, %v1624
        %1626 = vmatmul.f32.gmra.mxu0 %v1303
        %v1627 = vpop.f32.mrf.mxu0
        %v1628 = vadd.f32 0.0, %v1627
        %1629 = vmatmul.f32.gmra.mxu0 %v1306
        %v1630 = vpop.f32.mrf.mxu0
        %v1631 = vadd.f32 0.0, %v1630
        %1632 = vmatmul.f32.gmra.mxu0 %v1309
        %v1633 = vpop.f32.mrf.mxu0
        %v1634 = vadd.f32 0.0, %v1633
        %1635 = vmatmul.f32.gmra.mxu0 %v1312
        %v1636 = vpop.f32.mrf.mxu0
        %v1637 = vadd.f32 0.0, %v1636
        %1638 = vmatmul.f32.gmra.mxu0 %v1315
        %v1639 = vpop.f32.mrf.mxu0
        %v1640 = vadd.f32 0.0, %v1639
        %1641 = vmatmul.f32.gmra.mxu0 %v1318
        %v1642 = vpop.f32.mrf.mxu0
        %v1643 = vadd.f32 0.0, %v1642
        %1644 = vmatmul.f32.gmra.mxu0 %v1321
        %v1645 = vpop.f32.mrf.mxu0
        %v1646 = vadd.f32 0.0, %v1645
        %1647 = vmatmul.f32.gmra.mxu0 %v1324
        %v1648 = vpop.f32.mrf.mxu0
        %v1649 = vadd.f32 0.0, %v1648
        %1650 = vmatmul.f32.gmra.mxu0 %v1327
        %v1651 = vpop.f32.mrf.mxu0
        %v1652 = vadd.f32 0.0, %v1651
        %1653 = vmatmul.f32.gmra.mxu0 %v1330
        %v1654 = vpop.f32.mrf.mxu0
        %v1655 = vadd.f32 0.0, %v1654
        %1656 = vdwg.mxu0
        %1657 = vmatpush.msra.mxu0 0.0
        %1658 = vmatpush.msra.mxu0 0.0
        %1659 = vmatpush.msra.mxu0 0.0
        %1660 = vmatpush.msra.mxu0 0.0
        %1661 = vmatpush.msra.mxu0 0.0
        %1662 = vmatpush.msra.mxu0 0.0
        %1663 = vmatpush.msra.mxu0 0.0
        %1664 = vmatpush.msra.mxu0 0.0
        %1665 = vmatpush.msra.mxu0 %v1280
        %1666 = vmatpush.msra.mxu0 %v1272
        %1667 = vmatpush.msra.mxu0 %v1264
        %1668 = vmatpush.msra.mxu0 %v1256
        %1669 = vmatpush.msra.mxu0 %v1248
        %1670 = vmatpush.msra.mxu0 %v1240
        %1671 = vmatpush.msra.mxu0 %v1232
        %1672 = vmatpush.msra.mxu0 %v1224
        %1673 = vmatmul.f32.gmra.mxu0 %v1285
        %v1674 = vpop.f32.mrf.mxu0
        %v1675 = vadd.f32 0.0, %v1674
        %1676 = vmatmul.f32.gmra.mxu0 %v1288
        %v1677 = vpop.f32.mrf.mxu0
        %v1678 = vadd.f32 0.0, %v1677
        %1679 = vmatmul.f32.gmra.mxu0 %v1291
        %v1680 = vpop.f32.mrf.mxu0
        %v1681 = vadd.f32 0.0, %v1680
        %1682 = vmatmul.f32.gmra.mxu0 %v1294
        %v1683 = vpop.f32.mrf.mxu0
        %v1684 = vadd.f32 0.0, %v1683
        %1685 = vmatmul.f32.gmra.mxu0 %v1297
        %v1686 = vpop.f32.mrf.mxu0
        %v1687 = vadd.f32 0.0, %v1686
        %1688 = vmatmul.f32.gmra.mxu0 %v1300
        %v1689 = vpop.f32.mrf.mxu0
        %v1690 = vadd.f32 0.0, %v1689
        %1691 = vmatmul.f32.gmra.mxu0 %v1303
        %v1692 = vpop.f32.mrf.mxu0
        %v1693 = vadd.f32 0.0, %v1692
        %1694 = vmatmul.f32.gmra.mxu0 %v1306
        %v1695 = vpop.f32.mrf.mxu0
        %v1696 = vadd.f32 0.0, %v1695
        %1697 = vmatmul.f32.gmra.mxu0 %v1309
        %v1698 = vpop.f32.mrf.mxu0
        %v1699 = vadd.f32 0.0, %v1698
        %1700 = vmatmul.f32.gmra.mxu0 %v1312
        %v1701 = vpop.f32.mrf.mxu0
        %v1702 = vadd.f32 0.0, %v1701
        %1703 = vmatmul.f32.gmra.mxu0 %v1315
        %v1704 = vpop.f32.mrf.mxu0
        %v1705 = vadd.f32 0.0, %v1704
        %1706 = vmatmul.f32.gmra.mxu0 %v1318
        %v1707 = vpop.f32.mrf.mxu0
        %v1708 = vadd.f32 0.0, %v1707
        %1709 = vmatmul.f32.gmra.mxu0 %v1321
        %v1710 = vpop.f32.mrf.mxu0
        %v1711 = vadd.f32 0.0, %v1710
        %1712 = vmatmul.f32.gmra.mxu0 %v1324
        %v1713 = vpop.f32.mrf.mxu0
        %v1714 = vadd.f32 0.0, %v1713
        %1715 = vmatmul.f32.gmra.mxu0 %v1327
        %v1716 = vpop.f32.mrf.mxu0
        %v1717 = vadd.f32 0.0, %v1716
        %1718 = vmatmul.f32.gmra.mxu0 %v1330
        %v1719 = vpop.f32.mrf.mxu0
        %v1720 = vadd.f32 0.0, %v1719
        %1721 = vdwg.mxu0
        %1722 = vmatpush.msra.mxu0 0.0
        %1723 = vmatpush.msra.mxu0 0.0
        %1724 = vmatpush.msra.mxu0 0.0
        %1725 = vmatpush.msra.mxu0 0.0
        %1726 = vmatpush.msra.mxu0 0.0
        %1727 = vmatpush.msra.mxu0 0.0
        %1728 = vmatpush.msra.mxu0 0.0
        %1729 = vmatpush.msra.mxu0 0.0
        %1730 = vmatpush.msra.mxu0 %v1281
        %1731 = vmatpush.msra.mxu0 %v1273
        %1732 = vmatpush.msra.mxu0 %v1265
        %1733 = vmatpush.msra.mxu0 %v1257
        %1734 = vmatpush.msra.mxu0 %v1249
        %1735 = vmatpush.msra.mxu0 %v1241
        %1736 = vmatpush.msra.mxu0 %v1233
        %1737 = vmatpush.msra.mxu0 %v1225
        %1738 = vmatmul.f32.gmra.mxu0 %v1285
        %v1739 = vpop.f32.mrf.mxu0
        %v1740 = vadd.f32 0.0, %v1739
        %1741 = vmatmul.f32.gmra.mxu0 %v1288
        %v1742 = vpop.f32.mrf.mxu0
        %v1743 = vadd.f32 0.0, %v1742
        %1744 = vmatmul.f32.gmra.mxu0 %v1291
        %v1745 = vpop.f32.mrf.mxu0
        %v1746 = vadd.f32 0.0, %v1745
        %1747 = vmatmul.f32.gmra.mxu0 %v1294
        %v1748 = vpop.f32.mrf.mxu0
        %v1749 = vadd.f32 0.0, %v1748
        %1750 = vmatmul.f32.gmra.mxu0 %v1297
        %v1751 = vpop.f32.mrf.mxu0
        %v1752 = vadd.f32 0.0, %v1751
        %1753 = vmatmul.f32.gmra.mxu0 %v1300
        %v1754 = vpop.f32.mrf.mxu0
        %v1755 = vadd.f32 0.0, %v1754
        %1756 = vmatmul.f32.gmra.mxu0 %v1303
        %v1757 = vpop.f32.mrf.mxu0
        %v1758 = vadd.f32 0.0, %v1757
        %1759 = vmatmul.f32.gmra.mxu0 %v1306
        %v1760 = vpop.f32.mrf.mxu0
        %v1761 = vadd.f32 0.0, %v1760
        %1762 = vmatmul.f32.gmra.mxu0 %v1309
        %v1763 = vpop.f32.mrf.mxu0
        %v1764 = vadd.f32 0.0, %v1763
        %1765 = vmatmul.f32.gmra.mxu0 %v1312
        %v1766 = vpop.f32.mrf.mxu0
        %v1767 = vadd.f32 0.0, %v1766
        %1768 = vmatmul.f32.gmra.mxu0 %v1315
        %v1769 = vpop.f32.mrf.mxu0
        %v1770 = vadd.f32 0.0, %v1769
        %1771 = vmatmul.f32.gmra.mxu0 %v1318
        %v1772 = vpop.f32.mrf.mxu0
        %v1773 = vadd.f32 0.0, %v1772
        %1774 = vmatmul.f32.gmra.mxu0 %v1321
        %v1775 = vpop.f32.mrf.mxu0
        %v1776 = vadd.f32 0.0, %v1775
        %1777 = vmatmul.f32.gmra.mxu0 %v1324
        %v1778 = vpop.f32.mrf.mxu0
        %v1779 = vadd.f32 0.0, %v1778
        %1780 = vmatmul.f32.gmra.mxu0 %v1327
        %v1781 = vpop.f32.mrf.mxu0
        %v1782 = vadd.f32 0.0, %v1781
        %1783 = vmatmul.f32.gmra.mxu0 %v1330
        %v1784 = vpop.f32.mrf.mxu0
        %v1785 = vadd.f32 0.0, %v1784
        %1786 = vdwg.mxu0
        %1787 = vmatpush.msra.mxu0 0.0
        %1788 = vmatpush.msra.mxu0 0.0
        %1789 = vmatpush.msra.mxu0 0.0
        %1790 = vmatpush.msra.mxu0 0.0
        %1791 = vmatpush.msra.mxu0 0.0
        %1792 = vmatpush.msra.mxu0 0.0
        %1793 = vmatpush.msra.mxu0 0.0
        %1794 = vmatpush.msra.mxu0 0.0
        %1795 = vmatpush.msra.mxu0 %v1282
        %1796 = vmatpush.msra.mxu0 %v1274
        %1797 = vmatpush.msra.mxu0 %v1266
        %1798 = vmatpush.msra.mxu0 %v1258
        %1799 = vmatpush.msra.mxu0 %v1250
        %1800 = vmatpush.msra.mxu0 %v1242
        %1801 = vmatpush.msra.mxu0 %v1234
        %1802 = vmatpush.msra.mxu0 %v1226
        %1803 = vmatmul.f32.gmra.mxu0 %v1285
        %v1804 = vpop.f32.mrf.mxu0
        %v1805 = vadd.f32 0.0, %v1804
        %1806 = vmatmul.f32.gmra.mxu0 %v1288
        %v1807 = vpop.f32.mrf.mxu0
        %v1808 = vadd.f32 0.0, %v1807
        %1809 = vmatmul.f32.gmra.mxu0 %v1291
        %v1810 = vpop.f32.mrf.mxu0
        %v1811 = vadd.f32 0.0, %v1810
        %1812 = vmatmul.f32.gmra.mxu0 %v1294
        %v1813 = vpop.f32.mrf.mxu0
        %v1814 = vadd.f32 0.0, %v1813
        %1815 = vmatmul.f32.gmra.mxu0 %v1297
        %v1816 = vpop.f32.mrf.mxu0
        %v1817 = vadd.f32 0.0, %v1816
        %1818 = vmatmul.f32.gmra.mxu0 %v1300
        %v1819 = vpop.f32.mrf.mxu0
        %v1820 = vadd.f32 0.0, %v1819
        %1821 = vmatmul.f32.gmra.mxu0 %v1303
        %v1822 = vpop.f32.mrf.mxu0
        %v1823 = vadd.f32 0.0, %v1822
        %1824 = vmatmul.f32.gmra.mxu0 %v1306
        %v1825 = vpop.f32.mrf.mxu0
        %v1826 = vadd.f32 0.0, %v1825
        %1827 = vmatmul.f32.gmra.mxu0 %v1309
        %v1828 = vpop.f32.mrf.mxu0
        %v1829 = vadd.f32 0.0, %v1828
        %1830 = vmatmul.f32.gmra.mxu0 %v1312
        %v1831 = vpop.f32.mrf.mxu0
        %v1832 = vadd.f32 0.0, %v1831
        %1833 = vmatmul.f32.gmra.mxu0 %v1315
        %v1834 = vpop.f32.mrf.mxu0
        %v1835 = vadd.f32 0.0, %v1834
        %1836 = vmatmul.f32.gmra.mxu0 %v1318
        %v1837 = vpop.f32.mrf.mxu0
        %v1838 = vadd.f32 0.0, %v1837
        %1839 = vmatmul.f32.gmra.mxu0 %v1321
        %v1840 = vpop.f32.mrf.mxu0
        %v1841 = vadd.f32 0.0, %v1840
        %1842 = vmatmul.f32.gmra.mxu0 %v1324
        %v1843 = vpop.f32.mrf.mxu0
        %v1844 = vadd.f32 0.0, %v1843
        %1845 = vmatmul.f32.gmra.mxu0 %v1327
        %v1846 = vpop.f32.mrf.mxu0
        %v1847 = vadd.f32 0.0, %v1846
        %1848 = vmatmul.f32.gmra.mxu0 %v1330
        %v1849 = vpop.f32.mrf.mxu0
        %v1850 = vadd.f32 0.0, %v1849
        %1851 = vdwg.mxu0
        %1852 = vst [vmem:[%s208] sm:$0xff] %v1350
        %1853 = vst [vmem:[%s208 + $0x8] sm:$0xff] %v1415
        %1854 = vst [vmem:[%s208 + $0x10] sm:$0xff] %v1480
        %1855 = vst [vmem:[%s208 + $0x18] sm:$0xff] %v1545
        %1856 = vst [vmem:[%s208 + $0x20] sm:$0xff] %v1610
        %1857 = vst [vmem:[%s208 + $0x28] sm:$0xff] %v1675
        %1858 = vst [vmem:[%s208 + $0x30] sm:$0xff] %v1740
        %1859 = vst [vmem:[%s208 + $0x38] sm:$0xff] %v1805
        %1860 = vst [vmem:[%s208 + $0x40] sm:$0xff] %v1353
        %1861 = vst [vmem:[%s208 + $0x48] sm:$0xff] %v1418
        %1862 = vst [vmem:[%s208 + $0x50] sm:$0xff] %v1483
        %1863 = vst [vmem:[%s208 + $0x58] sm:$0xff] %v1548
        %1864 = vst [vmem:[%s208 + $0x60] sm:$0xff] %v1613
        %1865 = vst [vmem:[%s208 + $0x68] sm:$0xff] %v1678
        %1866 = vst [vmem:[%s208 + $0x70] sm:$0xff] %v1743
        %1867 = vst [vmem:[%s208 + $0x78] sm:$0xff] %v1808
        %1868 = vst [vmem:[%s208 + $0x80] sm:$0xff] %v1356
        %1869 = vst [vmem:[%s208 + $0x88] sm:$0xff] %v1421
        %1870 = vst [vmem:[%s208 + $0x90] sm:$0xff] %v1486
        %1871 = vst [vmem:[%s208 + $0x98] sm:$0xff] %v1551
        %1872 = vst [vmem:[%s208 + $0xa0] sm:$0xff] %v1616
        %1873 = vst [vmem:[%s208 + $0xa8] sm:$0xff] %v1681
        %1874 = vst [vmem:[%s208 + $0xb0] sm:$0xff] %v1746
        %1875 = vst [vmem:[%s208 + $0xb8] sm:$0xff] %v1811
        %1876 = vst [vmem:[%s208 + $0xc0] sm:$0xff] %v1359
        %1877 = vst [vmem:[%s208 + $0xc8] sm:$0xff] %v1424
        %1878 = vst [vmem:[%s208 + $0xd0] sm:$0xff] %v1489
        %1879 = vst [vmem:[%s208 + $0xd8] sm:$0xff] %v1554
        %1880 = vst [vmem:[%s208 + $0xe0] sm:$0xff] %v1619
        %1881 = vst [vmem:[%s208 + $0xe8] sm:$0xff] %v1684
        %1882 = vst [vmem:[%s208 + $0xf0] sm:$0xff] %v1749
        %1883 = vst [vmem:[%s208 + $0xf8] sm:$0xff] %v1814
        %1884 = vst [vmem:[%s208 + $0x100] sm:$0xff] %v1362
        %1885 = vst [vmem:[%s208 + $0x108] sm:$0xff] %v1427
        %1886 = vst [vmem:[%s208 + $0x110] sm:$0xff] %v1492
        %1887 = vst [vmem:[%s208 + $0x118] sm:$0xff] %v1557
        %1888 = vst [vmem:[%s208 + $0x120] sm:$0xff] %v1622
        %1889 = vst [vmem:[%s208 + $0x128] sm:$0xff] %v1687
        %1890 = vst [vmem:[%s208 + $0x130] sm:$0xff] %v1752
        %1891 = vst [vmem:[%s208 + $0x138] sm:$0xff] %v1817
        %1892 = vst [vmem:[%s208 + $0x140] sm:$0xff] %v1365
        %1893 = vst [vmem:[%s208 + $0x148] sm:$0xff] %v1430
        %1894 = vst [vmem:[%s208 + $0x150] sm:$0xff] %v1495
        %1895 = vst [vmem:[%s208 + $0x158] sm:$0xff] %v1560
        %1896 = vst [vmem:[%s208 + $0x160] sm:$0xff] %v1625
        %1897 = vst [vmem:[%s208 + $0x168] sm:$0xff] %v1690
        %1898 = vst [vmem:[%s208 + $0x170] sm:$0xff] %v1755
        %1899 = vst [vmem:[%s208 + $0x178] sm:$0xff] %v1820
        %1900 = vst [vmem:[%s208 + $0x180] sm:$0xff] %v1368
        %1901 = vst [vmem:[%s208 + $0x188] sm:$0xff] %v1433
        %1902 = vst [vmem:[%s208 + $0x190] sm:$0xff] %v1498
        %1903 = vst [vmem:[%s208 + $0x198] sm:$0xff] %v1563
        %1904 = vst [vmem:[%s208 + $0x1a0] sm:$0xff] %v1628
        %1905 = vst [vmem:[%s208 + $0x1a8] sm:$0xff] %v1693
        %1906 = vst [vmem:[%s208 + $0x1b0] sm:$0xff] %v1758
        %1907 = vst [vmem:[%s208 + $0x1b8] sm:$0xff] %v1823
        %1908 = vst [vmem:[%s208 + $0x1c0] sm:$0xff] %v1371
        %1909 = vst [vmem:[%s208 + $0x1c8] sm:$0xff] %v1436
        %1910 = vst [vmem:[%s208 + $0x1d0] sm:$0xff] %v1501
        %1911 = vst [vmem:[%s208 + $0x1d8] sm:$0xff] %v1566
        %1912 = vst [vmem:[%s208 + $0x1e0] sm:$0xff] %v1631
        %1913 = vst [vmem:[%s208 + $0x1e8] sm:$0xff] %v1696
        %1914 = vst [vmem:[%s208 + $0x1f0] sm:$0xff] %v1761
        %1915 = vst [vmem:[%s208 + $0x1f8] sm:$0xff] %v1826
        %1916 = vst [vmem:[%s208 + $0x200] sm:$0xff] %v1374
        %1917 = vst [vmem:[%s208 + $0x208] sm:$0xff] %v1439
        %1918 = vst [vmem:[%s208 + $0x210] sm:$0xff] %v1504
        %1919 = vst [vmem:[%s208 + $0x218] sm:$0xff] %v1569
        %1920 = vst [vmem:[%s208 + $0x220] sm:$0xff] %v1634
        %1921 = vst [vmem:[%s208 + $0x228] sm:$0xff] %v1699
        %1922 = vst [vmem:[%s208 + $0x230] sm:$0xff] %v1764
        %1923 = vst [vmem:[%s208 + $0x238] sm:$0xff] %v1829
        %1924 = vst [vmem:[%s208 + $0x240] sm:$0xff] %v1377
        %1925 = vst [vmem:[%s208 + $0x248] sm:$0xff] %v1442
        %1926 = vst [vmem:[%s208 + $0x250] sm:$0xff] %v1507
        %1927 = vst [vmem:[%s208 + $0x258] sm:$0xff] %v1572
        %1928 = vst [vmem:[%s208 + $0x260] sm:$0xff] %v1637
        %1929 = vst [vmem:[%s208 + $0x268] sm:$0xff] %v1702
        %1930 = vst [vmem:[%s208 + $0x270] sm:$0xff] %v1767
        %1931 = vst [vmem:[%s208 + $0x278] sm:$0xff] %v1832
        %1932 = vst [vmem:[%s208 + $0x280] sm:$0xff] %v1380
        %1933 = vst [vmem:[%s208 + $0x288] sm:$0xff] %v1445
        %1934 = vst [vmem:[%s208 + $0x290] sm:$0xff] %v1510
        %1935 = vst [vmem:[%s208 + $0x298] sm:$0xff] %v1575
        %1936 = vst [vmem:[%s208 + $0x2a0] sm:$0xff] %v1640
        %1937 = vst [vmem:[%s208 + $0x2a8] sm:$0xff] %v1705
        %1938 = vst [vmem:[%s208 + $0x2b0] sm:$0xff] %v1770
        %1939 = vst [vmem:[%s208 + $0x2b8] sm:$0xff] %v1835
        %1940 = vst [vmem:[%s208 + $0x2c0] sm:$0xff] %v1383
        %1941 = vst [vmem:[%s208 + $0x2c8] sm:$0xff] %v1448
        %1942 = vst [vmem:[%s208 + $0x2d0] sm:$0xff] %v1513
        %1943 = vst [vmem:[%s208 + $0x2d8] sm:$0xff] %v1578
        %1944 = vst [vmem:[%s208 + $0x2e0] sm:$0xff] %v1643
        %1945 = vst [vmem:[%s208 + $0x2e8] sm:$0xff] %v1708
        %1946 = vst [vmem:[%s208 + $0x2f0] sm:$0xff] %v1773
        %1947 = vst [vmem:[%s208 + $0x2f8] sm:$0xff] %v1838
        %1948 = vst [vmem:[%s208 + $0x300] sm:$0xff] %v1386
        %1949 = vst [vmem:[%s208 + $0x308] sm:$0xff] %v1451
        %1950 = vst [vmem:[%s208 + $0x310] sm:$0xff] %v1516
        %1951 = vst [vmem:[%s208 + $0x318] sm:$0xff] %v1581
        %1952 = vst [vmem:[%s208 + $0x320] sm:$0xff] %v1646
        %1953 = vst [vmem:[%s208 + $0x328] sm:$0xff] %v1711
        %1954 = vst [vmem:[%s208 + $0x330] sm:$0xff] %v1776
        %1955 = vst [vmem:[%s208 + $0x338] sm:$0xff] %v1841
        %1956 = vst [vmem:[%s208 + $0x340] sm:$0xff] %v1389
        %1957 = vst [vmem:[%s208 + $0x348] sm:$0xff] %v1454
        %1958 = vst [vmem:[%s208 + $0x350] sm:$0xff] %v1519
        %1959 = vst [vmem:[%s208 + $0x358] sm:$0xff] %v1584
        %1960 = vst [vmem:[%s208 + $0x360] sm:$0xff] %v1649
        %1961 = vst [vmem:[%s208 + $0x368] sm:$0xff] %v1714
        %1962 = vst [vmem:[%s208 + $0x370] sm:$0xff] %v1779
        %1963 = vst [vmem:[%s208 + $0x378] sm:$0xff] %v1844
        %1964 = vst [vmem:[%s208 + $0x380] sm:$0xff] %v1392
        %1965 = vst [vmem:[%s208 + $0x388] sm:$0xff] %v1457
        %1966 = vst [vmem:[%s208 + $0x390] sm:$0xff] %v1522
        %1967 = vst [vmem:[%s208 + $0x398] sm:$0xff] %v1587
        %1968 = vst [vmem:[%s208 + $0x3a0] sm:$0xff] %v1652
        %1969 = vst [vmem:[%s208 + $0x3a8] sm:$0xff] %v1717
        %1970 = vst [vmem:[%s208 + $0x3b0] sm:$0xff] %v1782
        %1971 = vst [vmem:[%s208 + $0x3b8] sm:$0xff] %v1847
        %1972 = vst [vmem:[%s208 + $0x3c0] sm:$0xff] %v1395
        %1973 = vst [vmem:[%s208 + $0x3c8] sm:$0xff] %v1460
        %1974 = vst [vmem:[%s208 + $0x3d0] sm:$0xff] %v1525
        %1975 = vst [vmem:[%s208 + $0x3d8] sm:$0xff] %v1590
        %1976 = vst [vmem:[%s208 + $0x3e0] sm:$0xff] %v1655
        %1977 = vst [vmem:[%s208 + $0x3e8] sm:$0xff] %v1720
        %1978 = vst [vmem:[%s208 + $0x3f0] sm:$0xff] %v1785
        %1979 = vst [vmem:[%s208 + $0x3f8] sm:$0xff] %v1850
        %s1980 = sand.u32 %s97, 1
        %s1981 = scalar_lea.sflag [#allocation5], %s1980
        %s1982 = sand.u32 %s97, 1
        %s1983 = smul.addr %s1982, 1024
        %s1984 = scalar_lea.vmem [#allocation8], %s1983
        // Predicated region
        $region41: #{tpu_custom_call.1} parent=31 // pred_check
          %p1985 = pneg %p107
        $region42: #{tpu_custom_call.1} parent=31 // pred_check_branch
          %1987 = sbr.rel (%p1985) target = $region44
        $region43: #{tpu_custom_call.1} parent=31 // pred_region
          %s1988 = smul.u32 16, %s21
          %1990 = vsyncadd %s1981, 0
          %s1991 = smul.addr %s1988, 8
          %s1992 = smul.addr %s1991, 8
          %s1993 = scalar_lea.hbm %s3, %s1992
          %s1994 = sshll.u32 %s1984, 4
          %s1995 = int_to_ptr.vmem [resolvable:$true] %s1994
          %s1996 = sshll.u32 %s1993, 4
          %s1997 = int_to_ptr.hbm [resolvable:$true] %s1996
          %2002 = dma.vmem_to_hbm [thread:$0]  %s1995, 16384, %s1997, %s1981, 1024, 1024, 64
        $region44: #{tpu_custom_call.1} parent=31 // pred_fallthru
          _
      $region32: #{tpu_custom_call.1} parent=5 // pred_fallthru
        _
      %p2003 = scmp.le.s32.totalorder 2, %s16
      // Predicated region
      $region45: #{tpu_custom_call.1} parent=5 // pred_check
        %p2004 = pneg %p2003
      $region46: #{tpu_custom_call.1} parent=5 // pred_check_branch
        %2006 = sbr.rel (%p2004) target = $region48
      $region47: #{tpu_custom_call.1} parent=5 // pred_region
        %s2007 = ssub.s32 %s16, 2
        // Predicated region
        $region49: #{tpu_custom_call.1} parent=47 // pred_check
          %p2008 = pneg %p113
        $region50: #{tpu_custom_call.1} parent=47 // pred_check_branch
          %2010 = sbr.rel (%p2008) target = $region52
        $region51: #{tpu_custom_call.1} parent=47 // pred_region
          %s2011 = sand.u32 %s98, 1
          %s2012 = scalar_lea.sflag [#allocation5], %s2011
          %s2013 = sand.u32 %s98, 1
          %s2014 = smul.addr %s2013, 1024
          %s2015 = scalar_lea.vmem [#allocation8], %s2014
          %2017 = dma.done %s2012, 16384
        $region52: #{tpu_custom_call.1} parent=47 // pred_fallthru
          _
      $region48: #{tpu_custom_call.1} parent=5 // pred_fallthru
        _
    $region6: #{tpu_custom_call.1} parent=1 // loop_footer
      %s20 = sadd.s32 1, %s16
    $region7: #{tpu_custom_call.1} parent=1 // loop_footer_branch
      %15 = sbr.rel target = $region3
    $region8: #{tpu_custom_call.1} parent=1 // loop_exit
      _
    %2018 = vsyncpa [#allocation4], 1
    %s2019 = scalar_lea.sflag [#allocation4], 1
    %2020 = vsyncpa %s2019, 1
    %2021 = vsyncpa [#allocation7], 1
    %2022 = vsyncpa [#allocation5], 1
    %s2023 = scalar_lea.sflag [#allocation5], 1
    %2024 = vsyncpa %s2023, 1

</llo_original>
